<compile_context>
chip_gen: v5e
topology: v5e:2x2
jax: 0.10.0
libtpu: 0.0.40
codegen_flags: <defaults>
</compile_context>

<pallas_src>
import numpy as np
import jax
import jax.numpy as jnp
from jax import lax
from jax.experimental import pallas as pl
from jax.experimental.pallas import tpu as pltpu


# ----------------------------- fused Pallas kernel ---------------------------

def _make_mraspp_kernel(dilations, H, W, M, compute_dtype):
    """conv_in + ASPP chain + branch sum over M = (images_per_step * H) rows."""
    nb = len(dilations)
    # Surviving row taps per dilation (|dy|*d >= H only ever reads zero padding).
    taps = tuple(tuple(dy for dy in (-1, 0, 1) if abs(dy) * d < H)
                 for d in dilations)

    def kernel(*refs):
        # refs: x, w_in, b_in, b_cat[0..nb-1], bias_all, out
        x_ref, win_ref, bin_ref = refs[0], refs[1], refs[2]
        b_refs = refs[3:3 + nb]          # per-dilation K-concatenated tap weights
        bias_ref = refs[3 + nb]          # (nb, 1, L) f32
        o_ref = refs[4 + nb]             # (M, L) f32

        # 1x1 conv_in as a single lane-merged matmul, f32 accumulate.
        x0 = jnp.dot(x_ref[...], win_ref[...],
                     preferred_element_type=jnp.float32) + bin_ref[...]

        # Per-image row index (rows are image-major: r = n*H + h).
        h_idx = lax.broadcasted_iota(jnp.int32, (M, 1), 0) % H

        prev = x0        # residual-chain carry (f32)
        total = x0       # running branch sum   (f32)
        for i, d in enumerate(dilations):
            # Row-shifted copies of `prev` for each surviving tap row: XLU roll
            # + VPU zero-mask (off the MXU), overlapping with the tap matmul.
            qs = []
            for dy in taps[i]:
                if dy == 0:
                    qs.append(prev.astype(compute_dtype))
                else:
                    shifted = pltpu.roll(prev, shift=(-dy * d) % M, axis=0)
                    valid = (h_idx + dy * d >= 0) & (h_idx + dy * d < H)
                    qs.append(jnp.where(valid, shifted,
                                        jnp.zeros_like(shifted)
                                        ).astype(compute_dtype))
            # K-concatenated taps -> ONE MXU weight push per dilation; the f32
            # accumulation across taps happens inside the matmul.
            q_cat = qs[0] if len(qs) == 1 else jnp.concatenate(qs, axis=-1)
            acc = jnp.dot(q_cat, b_refs[i][...],
                          preferred_element_type=jnp.float32)
            out = jnp.maximum(acc + bias_ref[i], 0.0) + prev
            total = total + out
            prev = out
        o_ref[...] = total

    return kernel


# ------------------------------ weight expansion ------------------------------

def _expand_params(params, dilations, H, W, compute_dtype):
    """Pre-expand weights into the lane-merged layout (one-time, tiny tensors)."""
    Cin, Cout = params["w_in"].shape
    L = W * Cout
    f32 = jnp.float32

    w_in_m = jnp.kron(jnp.eye(W, dtype=f32), params["w_in"])           # (W*Cin, L)
    b_in_m = jnp.tile(params["b_in"].reshape(1, Cout), (1, W))         # (1, L)

    b_cats = []
    for i, d in enumerate(dilations):
        w = params["w_aspp"][i]                                        # (3,3,Cout,Cout) HWIO
        blocks = []
        for jy, dy in enumerate((-1, 0, 1)):
            if abs(dy) * d >= H:                                       # zero padding only
                continue
            b = jnp.zeros((L, L), f32)
            for jx, dx in enumerate((-1, 0, 1)):
                if abs(dx) * d >= W:                                   # zero padding only
                    continue
                shift = np.eye(W, k=-dx * d, dtype=np.float32)         # out col w uses col w+dx*d
                b = b + jnp.kron(jnp.asarray(shift), w[jy, jx])
            blocks.append(b)
        # K-concatenate the surviving row taps: (n_taps*L, L)
        b_cats.append(jnp.concatenate(blocks, axis=0).astype(compute_dtype))

    bias_all = jnp.tile(
        jnp.stack([b.reshape(1, Cout) for b in params["b_aspp"]]),
        (1, 1, W))                                                     # (nb, 1, L)

    return (w_in_m.astype(compute_dtype), b_in_m.astype(f32),
            b_cats, bias_all.astype(f32))


# --------------------------------- wrapper ------------------------------------

def mraspp_forward(x, params, dilations, compute_dtype=jnp.bfloat16,
                   batch_parallel=False):
    """x: (N, H, W, Cin) NHWC -> (N, H, W, Cout).  Single fused pallas_call.

    batch_parallel=False (default): whole batch in one grid step (M = N*H rows),
    best on single-TC v5e/v6e.  batch_parallel=True: grid=(N,) with
    dimension_semantics=("parallel",) to use both TensorCores on v7x.
    """
    N, H, W, Cin = x.shape
    Cout = params["w_in"].shape[1]
    L = W * Cout
    nb = len(dilations)

    w_in_m, b_in_m, b_cats, bias_all = _expand_params(
        params, dilations, H, W, compute_dtype)
    x_m = x.reshape(N * H, W * Cin).astype(compute_dtype)              # lane-merged rows

    rows = H if batch_parallel else N * H                              # rows per grid step
    grid = (N,) if batch_parallel else (1,)

    def full_spec(a):
        nd = a.ndim
        return pl.BlockSpec(a.shape, lambda n, nd=nd: (0,) * nd)

    kernel = _make_mraspp_kernel(tuple(dilations), H, W, rows, compute_dtype)

    args = (x_m, w_in_m, b_in_m) + tuple(b_cats) + (bias_all,)
    flops = 2 * (N * H) * (W * Cin) * L \
        + sum(2 * (N * H) * int(b.shape[0]) * L for b in b_cats)
    bytes_accessed = sum(int(a.size) * a.dtype.itemsize for a in args) \
        + (N * H * L) * 4

    out_m = pl.pallas_call(
        kernel,
        out_shape=jax.ShapeDtypeStruct((N * H, L), jnp.float32),
        grid=grid,
        in_specs=[pl.BlockSpec((rows, W * Cin), lambda n: (n, 0)),     # activations
                  full_spec(w_in_m), full_spec(b_in_m)]
                 + [full_spec(b) for b in b_cats]
                 + [full_spec(bias_all)],
        out_specs=pl.BlockSpec((rows, L), lambda n: (n, 0)),           # lane-dense store
        compiler_params=pltpu.CompilerParams(
            dimension_semantics=("parallel",)),                        # 2 TCs on v7x when grid=(N,)
        cost_estimate=pl.CostEstimate(flops=int(flops), transcendentals=0,
                                      bytes_accessed=int(bytes_accessed)),
    )(*args)

    return out_m.reshape(N, H, W, Cout)


# ----------------------------- pure-JAX reference -----------------------------

def mraspp_reference(x, params, dilations):
    w_in = params["w_in"].reshape(1, 1, *params["w_in"].shape)         # HWIO
    y = lax.conv_general_dilated(x, w_in, (1, 1), "VALID",
                                 dimension_numbers=("NHWC", "HWIO", "NHWC"))
    y = y + params["b_in"].reshape(1, 1, 1, -1)
    outputs = [y]
    for i, d in enumerate(dilations):
        prev = outputs[-1]
        c = lax.conv_general_dilated(prev, params["w_aspp"][i], (1, 1),
                                     [(d, d), (d, d)], rhs_dilation=(d, d),
                                     dimension_numbers=("NHWC", "HWIO", "NHWC"))
        c = c + params["b_aspp"][i].reshape(1, 1, 1, -1)
        outputs.append(jnp.maximum(c, 0.0) + prev)
    total = outputs[0]
    for o in outputs[1:]:
        total = total + o
    return total


# ----------------------------------- main --------------------------------------

if __name__ == "__main__":
    N, Cin, Cout, H, W = 2, 4, 8, 16, 16
    dilations = [3, 6, 12, 18, 24]

    keys = jax.random.split(jax.random.PRNGKey(0), 3 + 2 * len(dilations))
    x = jax.random.normal(keys[0], (N, H, W, Cin), jnp.float32)

    params = {
        "w_in": 0.2 * jax.random.normal(keys[1], (Cin, Cout), jnp.float32),
        "b_in": 0.1 * jax.random.normal(keys[2], (1, Cout), jnp.float32),
        "w_aspp": [0.05 * jax.random.normal(keys[3 + 2 * i],
                                            (3, 3, Cout, Cout), jnp.float32)
                   for i in range(len(dilations))],
        "b_aspp": [0.1 * jax.random.normal(keys[4 + 2 * i],
                                           (1, Cout), jnp.float32)
                   for i in range(len(dilations))],
    }

    ref = mraspp_reference(x, params, dilations)
    jax.block_until_ready(ref)

    # Strict f32 compute path (validation of the roll+mask / K-concat rewrite).
    out_f32 = mraspp_forward(x, params, dilations, compute_dtype=jnp.float32)
    jax.block_until_ready(out_f32)
    np.testing.assert_allclose(np.asarray(out_f32), np.asarray(ref),
                               rtol=1e-3, atol=1e-3)

    # Default bf16 MXU path (f32 accumulators / residual chain / branch sum).
    out_bf16 = mraspp_forward(x, params, dilations)
    jax.block_until_ready(out_bf16)
    np.testing.assert_allclose(np.asarray(out_bf16), np.asarray(ref),
                               rtol=1e-1, atol=1e-1)

    # v7x-style 2-TensorCore variant: grid=(N,) with parallel semantics.
    out_par = mraspp_forward(x, params, dilations, batch_parallel=True)
    jax.block_until_ready(out_par)
    np.testing.assert_allclose(np.asarray(out_par), np.asarray(ref),
                               rtol=1e-1, atol=1e-1)

    print("KERNEL_OK")
</pallas_src>

<mosaic_0001>
module attributes {stable_mosaic.version = 11 : i64} {
  func.func @kernel(%arg0: i32, %arg1: memref<32x64xf32, #tpu.memory_space<vmem>>, %arg2: memref<64x128xf32, #tpu.memory_space<vmem>>, %arg3: memref<1x128xf32, #tpu.memory_space<vmem>>, %arg4: memref<384x128xf32, #tpu.memory_space<vmem>>, %arg5: memref<384x128xf32, #tpu.memory_space<vmem>>, %arg6: memref<384x128xf32, #tpu.memory_space<vmem>>, %arg7: memref<128x128xf32, #tpu.memory_space<vmem>>, %arg8: memref<128x128xf32, #tpu.memory_space<vmem>>, %arg9: memref<5x1x128xf32, #tpu.memory_space<vmem>>, %arg10: memref<32x128xf32, #tpu.memory_space<vmem>>) attributes {dimension_semantics = [#tpu.dimension_semantics<parallel>], iteration_bounds = array<i64: 1>, scalar_prefetch = 0 : i64, scratch_operands = 0 : i64, tpu.core_type = #tpu.core_type<tc>, window_params = [{transform_indices = @transform_0, window_bounds = array<i64: 32, 64>}, {pipeline_mode = #tpu.pipeline_mode<synchronous>, transform_indices = @transform_1, window_bounds = array<i64: 64, 128>}, {pipeline_mode = #tpu.pipeline_mode<synchronous>, transform_indices = @transform_2, window_bounds = array<i64: 1, 128>}, {pipeline_mode = #tpu.pipeline_mode<synchronous>, transform_indices = @transform_3, window_bounds = array<i64: 384, 128>}, {pipeline_mode = #tpu.pipeline_mode<synchronous>, transform_indices = @transform_4, window_bounds = array<i64: 384, 128>}, {pipeline_mode = #tpu.pipeline_mode<synchronous>, transform_indices = @transform_5, window_bounds = array<i64: 384, 128>}, {pipeline_mode = #tpu.pipeline_mode<synchronous>, transform_indices = @transform_6, window_bounds = array<i64: 128, 128>}, {pipeline_mode = #tpu.pipeline_mode<synchronous>, transform_indices = @transform_7, window_bounds = array<i64: 128, 128>}, {pipeline_mode = #tpu.pipeline_mode<synchronous>, transform_indices = @transform_8, window_bounds = array<i64: 5, 1, 128>}, {transform_indices = @transform_9, window_bounds = array<i64: 32, 128>}]} {
    %c0 = arith.constant 0 : index
    %c0_0 = arith.constant 0 : index
    %0 = vector.load %arg1[%c0, %c0_0] : memref<32x64xf32, #tpu.memory_space<vmem>>, vector<32x64xf32>
    %c0_1 = arith.constant 0 : index
    %c0_2 = arith.constant 0 : index
    %1 = vector.load %arg2[%c0_1, %c0_2] : memref<64x128xf32, #tpu.memory_space<vmem>>, vector<64x128xf32>
    %cst = arith.constant dense<0.000000e+00> : vector<32x128xf32>
    %2 = tpu.matmul %0, %1, %cst {dimension_numbers = #tpu.dot_dimension_numbers<[1], [0], [0], [1], [0, 0, 1, 1], [], []>} : vector<32x64xf32>, vector<64x128xf32>, vector<32x128xf32> -> vector<32x128xf32>
    %c0_3 = arith.constant 0 : index
    %c0_4 = arith.constant 0 : index
    %3 = vector.load %arg3[%c0_3, %c0_4] : memref<1x128xf32, #tpu.memory_space<vmem>>, vector<1x128xf32>
    %4 = vector.broadcast %3 : vector<1x128xf32> to vector<32x128xf32>
    %5 = arith.addf %2, %4 : vector<32x128xf32>
    %6 = tpu.iota {dimensions = array<i32: 0>} : vector<32x1xi32>
    %c16_i32 = arith.constant 16 : i32
    %c0_i32 = arith.constant 0 : i32
    %7 = arith.cmpi eq, %c16_i32, %c0_i32 : i32
    %c1_i32 = arith.constant 1 : i32
    %8 = arith.select %7, %c1_i32, %c16_i32 : i32
    %9 = vector.broadcast %8 : i32 to vector<32x1xi32>
    %10 = arith.remsi %6, %9 : vector<32x1xi32>
    %c0_i32_5 = arith.constant 0 : i32
    %11 = vector.broadcast %c0_i32_5 : i32 to vector<32x1xi32>
    %12 = arith.cmpi ne, %10, %11 : vector<32x1xi32>
    %c0_i32_6 = arith.constant 0 : i32
    %13 = vector.broadcast %c0_i32_6 : i32 to vector<32x1xi32>
    %14 = arith.cmpi slt, %10, %13 : vector<32x1xi32>
    %c0_i32_7 = arith.constant 0 : i32
    %15 = arith.cmpi slt, %8, %c0_i32_7 : i32
    %16 = vector.broadcast %15 : i1 to vector<32x1xi1>
    %17 = vector.broadcast %16 : vector<32x1xi1> to vector<32x1xi1>
    %18 = arith.xori %14, %17 : vector<32x1xi1>
    %19 = arith.andi %18, %12 : vector<32x1xi1>
    %20 = vector.broadcast %8 : i32 to vector<32x1xi32>
    %21 = arith.addi %10, %20 : vector<32x1xi32>
    %22 = arith.select %19, %21, %10 : vector<32x1xi1>, vector<32x1xi32>
    %c3_i32 = arith.constant 3 : i32
    %23 = tpu.dynamic_rotate %5 by %c3_i32 dim 0 : vector<32x128xf32>, i32 -> vector<32x128xf32>
    %c-3_i32 = arith.constant -3 : i32
    %24 = vector.broadcast %c-3_i32 : i32 to vector<32x1xi32>
    %25 = arith.addi %22, %24 : vector<32x1xi32>
    %c0_i32_8 = arith.constant 0 : i32
    %26 = vector.broadcast %c0_i32_8 : i32 to vector<32x1xi32>
    %27 = arith.cmpi sge, %25, %26 : vector<32x1xi32>
    %c-3_i32_9 = arith.constant -3 : i32
    %28 = vector.broadcast %c-3_i32_9 : i32 to vector<32x1xi32>
    %29 = arith.addi %22, %28 : vector<32x1xi32>
    %c16_i32_10 = arith.constant 16 : i32
    %30 = vector.broadcast %c16_i32_10 : i32 to vector<32x1xi32>
    %31 = arith.cmpi slt, %29, %30 : vector<32x1xi32>
    %32 = arith.andi %27, %31 : vector<32x1xi1>
    %cst_11 = arith.constant 0.000000e+00 : f32
    %33 = vector.broadcast %cst_11 : f32 to vector<32x128xf32>
    %34 = vector.shape_cast %32 : vector<32x1xi1> to vector<32x1xi1>
    %35 = vector.broadcast %34 : vector<32x1xi1> to vector<32x128xi1>
    %36 = arith.select %35, %23, %33 : vector<32x128xi1>, vector<32x128xf32>
    %c29_i32 = arith.constant 29 : i32
    %37 = tpu.dynamic_rotate %5 by %c29_i32 dim 0 : vector<32x128xf32>, i32 -> vector<32x128xf32>
    %c3_i32_12 = arith.constant 3 : i32
    %38 = vector.broadcast %c3_i32_12 : i32 to vector<32x1xi32>
    %39 = arith.addi %22, %38 : vector<32x1xi32>
    %c0_i32_13 = arith.constant 0 : i32
    %40 = vector.broadcast %c0_i32_13 : i32 to vector<32x1xi32>
    %41 = arith.cmpi sge, %39, %40 : vector<32x1xi32>
    %c3_i32_14 = arith.constant 3 : i32
    %42 = vector.broadcast %c3_i32_14 : i32 to vector<32x1xi32>
    %43 = arith.addi %22, %42 : vector<32x1xi32>
    %c16_i32_15 = arith.constant 16 : i32
    %44 = vector.broadcast %c16_i32_15 : i32 to vector<32x1xi32>
    %45 = arith.cmpi slt, %43, %44 : vector<32x1xi32>
    %46 = arith.andi %41, %45 : vector<32x1xi1>
    %cst_16 = arith.constant 0.000000e+00 : f32
    %47 = vector.broadcast %cst_16 : f32 to vector<32x128xf32>
    %48 = vector.shape_cast %46 : vector<32x1xi1> to vector<32x1xi1>
    %49 = vector.broadcast %48 : vector<32x1xi1> to vector<32x128xi1>
    %50 = arith.select %49, %37, %47 : vector<32x128xi1>, vector<32x128xf32>
    %51 = tpu.concatenate %36, %5, %50 in 1 : vector<32x128xf32>, vector<32x128xf32>, vector<32x128xf32> -> vector<32x384xf32>
    %c0_17 = arith.constant 0 : index
    %c0_18 = arith.constant 0 : index
    %52 = vector.load %arg4[%c0_17, %c0_18] : memref<384x128xf32, #tpu.memory_space<vmem>>, vector<384x128xf32>
    %cst_19 = arith.constant dense<0.000000e+00> : vector<32x128xf32>
    %53 = tpu.matmul %51, %52, %cst_19 {dimension_numbers = #tpu.dot_dimension_numbers<[1], [0], [0], [1], [0, 0, 1, 1], [], []>} : vector<32x384xf32>, vector<384x128xf32>, vector<32x128xf32> -> vector<32x128xf32>
    %c0_20 = arith.constant 0 : index
    %c0_21 = arith.constant 0 : index
    %c0_22 = arith.constant 0 : index
    %54 = vector.load %arg9[%c0_20, %c0_21, %c0_22] : memref<5x1x128xf32, #tpu.memory_space<vmem>>, vector<1x1x128xf32>
    %55 = vector.shape_cast %54 : vector<1x1x128xf32> to vector<1x128xf32>
    %56 = vector.broadcast %55 : vector<1x128xf32> to vector<32x128xf32>
    %57 = arith.addf %53, %56 : vector<32x128xf32>
    %cst_23 = arith.constant 0.000000e+00 : f32
    %58 = vector.broadcast %cst_23 : f32 to vector<32x128xf32>
    %59 = arith.maximumf %57, %58 : vector<32x128xf32>
    %60 = arith.addf %59, %5 : vector<32x128xf32>
    %61 = arith.addf %5, %60 : vector<32x128xf32>
    %c6_i32 = arith.constant 6 : i32
    %62 = tpu.dynamic_rotate %60 by %c6_i32 dim 0 : vector<32x128xf32>, i32 -> vector<32x128xf32>
    %c-6_i32 = arith.constant -6 : i32
    %63 = vector.broadcast %c-6_i32 : i32 to vector<32x1xi32>
    %64 = arith.addi %22, %63 : vector<32x1xi32>
    %c0_i32_24 = arith.constant 0 : i32
    %65 = vector.broadcast %c0_i32_24 : i32 to vector<32x1xi32>
    %66 = arith.cmpi sge, %64, %65 : vector<32x1xi32>
    %c-6_i32_25 = arith.constant -6 : i32
    %67 = vector.broadcast %c-6_i32_25 : i32 to vector<32x1xi32>
    %68 = arith.addi %22, %67 : vector<32x1xi32>
    %c16_i32_26 = arith.constant 16 : i32
    %69 = vector.broadcast %c16_i32_26 : i32 to vector<32x1xi32>
    %70 = arith.cmpi slt, %68, %69 : vector<32x1xi32>
    %71 = arith.andi %66, %70 : vector<32x1xi1>
    %cst_27 = arith.constant 0.000000e+00 : f32
    %72 = vector.broadcast %cst_27 : f32 to vector<32x128xf32>
    %73 = vector.shape_cast %71 : vector<32x1xi1> to vector<32x1xi1>
    %74 = vector.broadcast %73 : vector<32x1xi1> to vector<32x128xi1>
    %75 = arith.select %74, %62, %72 : vector<32x128xi1>, vector<32x128xf32>
    %c26_i32 = arith.constant 26 : i32
    %76 = tpu.dynamic_rotate %60 by %c26_i32 dim 0 : vector<32x128xf32>, i32 -> vector<32x128xf32>
    %c6_i32_28 = arith.constant 6 : i32
    %77 = vector.broadcast %c6_i32_28 : i32 to vector<32x1xi32>
    %78 = arith.addi %22, %77 : vector<32x1xi32>
    %c0_i32_29 = arith.constant 0 : i32
    %79 = vector.broadcast %c0_i32_29 : i32 to vector<32x1xi32>
    %80 = arith.cmpi sge, %78, %79 : vector<32x1xi32>
    %c6_i32_30 = arith.constant 6 : i32
    %81 = vector.broadcast %c6_i32_30 : i32 to vector<32x1xi32>
    %82 = arith.addi %22, %81 : vector<32x1xi32>
    %c16_i32_31 = arith.constant 16 : i32
    %83 = vector.broadcast %c16_i32_31 : i32 to vector<32x1xi32>
    %84 = arith.cmpi slt, %82, %83 : vector<32x1xi32>
    %85 = arith.andi %80, %84 : vector<32x1xi1>
    %cst_32 = arith.constant 0.000000e+00 : f32
    %86 = vector.broadcast %cst_32 : f32 to vector<32x128xf32>
    %87 = vector.shape_cast %85 : vector<32x1xi1> to vector<32x1xi1>
    %88 = vector.broadcast %87 : vector<32x1xi1> to vector<32x128xi1>
    %89 = arith.select %88, %76, %86 : vector<32x128xi1>, vector<32x128xf32>
    %90 = tpu.concatenate %75, %60, %89 in 1 : vector<32x128xf32>, vector<32x128xf32>, vector<32x128xf32> -> vector<32x384xf32>
    %c0_33 = arith.constant 0 : index
    %c0_34 = arith.constant 0 : index
    %91 = vector.load %arg5[%c0_33, %c0_34] : memref<384x128xf32, #tpu.memory_space<vmem>>, vector<384x128xf32>
    %cst_35 = arith.constant dense<0.000000e+00> : vector<32x128xf32>
    %92 = tpu.matmul %90, %91, %cst_35 {dimension_numbers = #tpu.dot_dimension_numbers<[1], [0], [0], [1], [0, 0, 1, 1], [], []>} : vector<32x384xf32>, vector<384x128xf32>, vector<32x128xf32> -> vector<32x128xf32>
    %c1 = arith.constant 1 : index
    %c0_36 = arith.constant 0 : index
    %c0_37 = arith.constant 0 : index
    %93 = vector.load %arg9[%c1, %c0_36, %c0_37] : memref<5x1x128xf32, #tpu.memory_space<vmem>>, vector<1x1x128xf32>
    %94 = vector.shape_cast %93 : vector<1x1x128xf32> to vector<1x128xf32>
    %95 = vector.broadcast %94 : vector<1x128xf32> to vector<32x128xf32>
    %96 = arith.addf %92, %95 : vector<32x128xf32>
    %cst_38 = arith.constant 0.000000e+00 : f32
    %97 = vector.broadcast %cst_38 : f32 to vector<32x128xf32>
    %98 = arith.maximumf %96, %97 : vector<32x128xf32>
    %99 = arith.addf %98, %60 : vector<32x128xf32>
    %100 = arith.addf %61, %99 : vector<32x128xf32>
    %c12_i32 = arith.constant 12 : i32
    %101 = tpu.dynamic_rotate %99 by %c12_i32 dim 0 : vector<32x128xf32>, i32 -> vector<32x128xf32>
    %c-12_i32 = arith.constant -12 : i32
    %102 = vector.broadcast %c-12_i32 : i32 to vector<32x1xi32>
    %103 = arith.addi %22, %102 : vector<32x1xi32>
    %c0_i32_39 = arith.constant 0 : i32
    %104 = vector.broadcast %c0_i32_39 : i32 to vector<32x1xi32>
    %105 = arith.cmpi sge, %103, %104 : vector<32x1xi32>
    %c-12_i32_40 = arith.constant -12 : i32
    %106 = vector.broadcast %c-12_i32_40 : i32 to vector<32x1xi32>
    %107 = arith.addi %22, %106 : vector<32x1xi32>
    %c16_i32_41 = arith.constant 16 : i32
    %108 = vector.broadcast %c16_i32_41 : i32 to vector<32x1xi32>
    %109 = arith.cmpi slt, %107, %108 : vector<32x1xi32>
    %110 = arith.andi %105, %109 : vector<32x1xi1>
    %cst_42 = arith.constant 0.000000e+00 : f32
    %111 = vector.broadcast %cst_42 : f32 to vector<32x128xf32>
    %112 = vector.shape_cast %110 : vector<32x1xi1> to vector<32x1xi1>
    %113 = vector.broadcast %112 : vector<32x1xi1> to vector<32x128xi1>
    %114 = arith.select %113, %101, %111 : vector<32x128xi1>, vector<32x128xf32>
    %c20_i32 = arith.constant 20 : i32
    %115 = tpu.dynamic_rotate %99 by %c20_i32 dim 0 : vector<32x128xf32>, i32 -> vector<32x128xf32>
    %c12_i32_43 = arith.constant 12 : i32
    %116 = vector.broadcast %c12_i32_43 : i32 to vector<32x1xi32>
    %117 = arith.addi %22, %116 : vector<32x1xi32>
    %c0_i32_44 = arith.constant 0 : i32
    %118 = vector.broadcast %c0_i32_44 : i32 to vector<32x1xi32>
    %119 = arith.cmpi sge, %117, %118 : vector<32x1xi32>
    %c12_i32_45 = arith.constant 12 : i32
    %120 = vector.broadcast %c12_i32_45 : i32 to vector<32x1xi32>
    %121 = arith.addi %22, %120 : vector<32x1xi32>
    %c16_i32_46 = arith.constant 16 : i32
    %122 = vector.broadcast %c16_i32_46 : i32 to vector<32x1xi32>
    %123 = arith.cmpi slt, %121, %122 : vector<32x1xi32>
    %124 = arith.andi %119, %123 : vector<32x1xi1>
    %cst_47 = arith.constant 0.000000e+00 : f32
    %125 = vector.broadcast %cst_47 : f32 to vector<32x128xf32>
    %126 = vector.shape_cast %124 : vector<32x1xi1> to vector<32x1xi1>
    %127 = vector.broadcast %126 : vector<32x1xi1> to vector<32x128xi1>
    %128 = arith.select %127, %115, %125 : vector<32x128xi1>, vector<32x128xf32>
    %129 = tpu.concatenate %114, %99, %128 in 1 : vector<32x128xf32>, vector<32x128xf32>, vector<32x128xf32> -> vector<32x384xf32>
    %c0_48 = arith.constant 0 : index
    %c0_49 = arith.constant 0 : index
    %130 = vector.load %arg6[%c0_48, %c0_49] : memref<384x128xf32, #tpu.memory_space<vmem>>, vector<384x128xf32>
    %cst_50 = arith.constant dense<0.000000e+00> : vector<32x128xf32>
    %131 = tpu.matmul %129, %130, %cst_50 {dimension_numbers = #tpu.dot_dimension_numbers<[1], [0], [0], [1], [0, 0, 1, 1], [], []>} : vector<32x384xf32>, vector<384x128xf32>, vector<32x128xf32> -> vector<32x128xf32>
    %c2 = arith.constant 2 : index
    %c0_51 = arith.constant 0 : index
    %c0_52 = arith.constant 0 : index
    %132 = vector.load %arg9[%c2, %c0_51, %c0_52] : memref<5x1x128xf32, #tpu.memory_space<vmem>>, vector<1x1x128xf32>
    %133 = vector.shape_cast %132 : vector<1x1x128xf32> to vector<1x128xf32>
    %134 = vector.broadcast %133 : vector<1x128xf32> to vector<32x128xf32>
    %135 = arith.addf %131, %134 : vector<32x128xf32>
    %cst_53 = arith.constant 0.000000e+00 : f32
    %136 = vector.broadcast %cst_53 : f32 to vector<32x128xf32>
    %137 = arith.maximumf %135, %136 : vector<32x128xf32>
    %138 = arith.addf %137, %99 : vector<32x128xf32>
    %139 = arith.addf %100, %138 : vector<32x128xf32>
    %c0_54 = arith.constant 0 : index
    %c0_55 = arith.constant 0 : index
    %140 = vector.load %arg7[%c0_54, %c0_55] : memref<128x128xf32, #tpu.memory_space<vmem>>, vector<128x128xf32>
    %cst_56 = arith.constant dense<0.000000e+00> : vector<32x128xf32>
    %141 = tpu.matmul %138, %140, %cst_56 {dimension_numbers = #tpu.dot_dimension_numbers<[1], [0], [0], [1], [0, 0, 1, 1], [], []>} : vector<32x128xf32>, vector<128x128xf32>, vector<32x128xf32> -> vector<32x128xf32>
    %c3 = arith.constant 3 : index
    %c0_57 = arith.constant 0 : index
    %c0_58 = arith.constant 0 : index
    %142 = vector.load %arg9[%c3, %c0_57, %c0_58] : memref<5x1x128xf32, #tpu.memory_space<vmem>>, vector<1x1x128xf32>
    %143 = vector.shape_cast %142 : vector<1x1x128xf32> to vector<1x128xf32>
    %144 = vector.broadcast %143 : vector<1x128xf32> to vector<32x128xf32>
    %145 = arith.addf %141, %144 : vector<32x128xf32>
    %cst_59 = arith.constant 0.000000e+00 : f32
    %146 = vector.broadcast %cst_59 : f32 to vector<32x128xf32>
    %147 = arith.maximumf %145, %146 : vector<32x128xf32>
    %148 = arith.addf %147, %138 : vector<32x128xf32>
    %149 = arith.addf %139, %148 : vector<32x128xf32>
    %c0_60 = arith.constant 0 : index
    %c0_61 = arith.constant 0 : index
    %150 = vector.load %arg8[%c0_60, %c0_61] : memref<128x128xf32, #tpu.memory_space<vmem>>, vector<128x128xf32>
    %cst_62 = arith.constant dense<0.000000e+00> : vector<32x128xf32>
    %151 = tpu.matmul %148, %150, %cst_62 {dimension_numbers = #tpu.dot_dimension_numbers<[1], [0], [0], [1], [0, 0, 1, 1], [], []>} : vector<32x128xf32>, vector<128x128xf32>, vector<32x128xf32> -> vector<32x128xf32>
    %c4 = arith.constant 4 : index
    %c0_63 = arith.constant 0 : index
    %c0_64 = arith.constant 0 : index
    %152 = vector.load %arg9[%c4, %c0_63, %c0_64] : memref<5x1x128xf32, #tpu.memory_space<vmem>>, vector<1x1x128xf32>
    %153 = vector.shape_cast %152 : vector<1x1x128xf32> to vector<1x128xf32>
    %154 = vector.broadcast %153 : vector<1x128xf32> to vector<32x128xf32>
    %155 = arith.addf %151, %154 : vector<32x128xf32>
    %cst_65 = arith.constant 0.000000e+00 : f32
    %156 = vector.broadcast %cst_65 : f32 to vector<32x128xf32>
    %157 = arith.maximumf %155, %156 : vector<32x128xf32>
    %158 = arith.addf %157, %148 : vector<32x128xf32>
    %159 = arith.addf %149, %158 : vector<32x128xf32>
    %c0_66 = arith.constant 0 : index
    %c0_67 = arith.constant 0 : index
    %160 = vector.load %arg10[%c0_66, %c0_67] : memref<32x128xf32, #tpu.memory_space<vmem>>, vector<32x128xf32>
    tpu.vector_store %arg10[%c0_66, %c0_67], %159 {strides = array<i32>} : memref<32x128xf32, #tpu.memory_space<vmem>>, vector<32x128xf32>,
    return
  }
  func.func @transform_0(%arg0: i32) -> (i32, i32) {
    %c0_i32 = arith.constant 0 : i32
    %c0_i32_0 = arith.constant 0 : i32
    return %arg0, %c0_i32 : i32, i32
  }
  func.func @transform_1(%arg0: i32) -> (i32, i32) {
    %c0_i32 = arith.constant 0 : i32
    %c0_i32_0 = arith.constant 0 : i32
    %c0_i32_1 = arith.constant 0 : i32
    return %c0_i32, %c0_i32_0 : i32, i32
  }
  func.func @transform_2(%arg0: i32) -> (i32, i32) {
    %c0_i32 = arith.constant 0 : i32
    %c0_i32_0 = arith.constant 0 : i32
    %c0_i32_1 = arith.constant 0 : i32
    return %c0_i32, %c0_i32_0 : i32, i32
  }
  func.func @transform_3(%arg0: i32) -> (i32, i32) {
    %c0_i32 = arith.constant 0 : i32
    %c0_i32_0 = arith.constant 0 : i32
    %c0_i32_1 = arith.constant 0 : i32
    return %c0_i32, %c0_i32_0 : i32, i32
  }
  func.func @transform_4(%arg0: i32) -> (i32, i32) {
    %c0_i32 = arith.constant 0 : i32
    %c0_i32_0 = arith.constant 0 : i32
    %c0_i32_1 = arith.constant 0 : i32
    return %c0_i32, %c0_i32_0 : i32, i32
  }
  func.func @transform_5(%arg0: i32) -> (i32, i32) {
    %c0_i32 = arith.constant 0 : i32
    %c0_i32_0 = arith.constant 0 : i32
    %c0_i32_1 = arith.constant 0 : i32
    return %c0_i32, %c0_i32_0 : i32, i32
  }
  func.func @transform_6(%arg0: i32) -> (i32, i32) {
    %c0_i32 = arith.constant 0 : i32
    %c0_i32_0 = arith.constant 0 : i32
    %c0_i32_1 = arith.constant 0 : i32
    return %c0_i32, %c0_i32_0 : i32, i32
  }
  func.func @transform_7(%arg0: i32) -> (i32, i32) {
    %c0_i32 = arith.constant 0 : i32
    %c0_i32_0 = arith.constant 0 : i32
    %c0_i32_1 = arith.constant 0 : i32
    return %c0_i32, %c0_i32_0 : i32, i32
  }
  func.func @transform_8(%arg0: i32) -> (i32, i32, i32) {
    %c0_i32 = arith.constant 0 : i32
    %c0_i32_0 = arith.constant 0 : i32
    %c0_i32_1 = arith.constant 0 : i32
    %c0_i32_2 = arith.constant 0 : i32
    return %c0_i32, %c0_i32_0, %c0_i32_1 : i32, i32, i32
  }
  func.func @transform_9(%arg0: i32) -> (i32, i32) {
    %c0_i32 = arith.constant 0 : i32
    %c0_i32_0 = arith.constant 0 : i32
    return %arg0, %c0_i32 : i32, i32
  }
}

</mosaic_0001>

<llo_original>
// kernel: tpu_custom_call.1
$region0: #{tpu_custom_call.1}
  #allocation0 [shape = 'u32[]', space=smem, size = 0x4, offset = 0x4, fixed_abs, tag = 'smem constant byte address 0x4 - core index']
  #allocation1 [shape = 'u32[72,128]{1,0:T(1,128)}', space=vmem, size = 0x9000, scoped, tag = 'internal scratch']
  %s0 = inlined_call_operand.hbm [shape: f32[32,64], index: 0, kind: input, shape index: {}]
  %s1 = inlined_call_operand.hbm [shape: f32[64,128], index: 1, kind: input, shape index: {}]
  %s2 = inlined_call_operand.vmem [shape: f32[1,128], index: 2, kind: input, shape index: {}]
  %s3 = inlined_call_operand.hbm [shape: f32[384,128], index: 3, kind: input, shape index: {}]
  %s4 = inlined_call_operand.hbm [shape: f32[384,128], index: 4, kind: input, shape index: {}]
  %s5 = inlined_call_operand.hbm [shape: f32[384,128], index: 5, kind: input, shape index: {}]
  %s6 = inlined_call_operand.hbm [shape: f32[128,128], index: 6, kind: input, shape index: {}]
  %s7 = inlined_call_operand.hbm [shape: f32[128,128], index: 7, kind: input, shape index: {}]
  %s8 = inlined_call_operand.vmem [shape: f32[5,1,128], index: 8, kind: input, shape index: {}]
  %s9 = inlined_call_operand.hbm [shape: f32[32,128], index: 9, kind: output, shape index: {}]
  %s10 = sld [smem:[#allocation0]]
  $region74: #{tpu_custom_call.1} parent=0
    _
  %s12 = ssub.s32 1, %s10
  %s13 = scalar_select 0, %s12, %s10
  $region1: #{tpu_custom_call.1} parent=0
    #allocation2 [shape = 'u8[16384]{0}', space=vmem, size = 0x4000, scoped, tag = 'input window, operand 0, single buffered']
    #allocation3 [shape = 's32[1]{0}', space=sflag, size = 0x4, scoped, tag = 'scoped memory for tpu_custom_call.1']
    #allocation4 [shape = 's32[1]{0}', space=sflag, size = 0x4, scoped, tag = 'scoped memory for tpu_custom_call.1']
    #allocation5 [shape = 'u8[32768]{0}', space=vmem, size = 0x8000, scoped, tag = 'input window, operand 1, single buffered']
    #allocation6 [shape = 's32[1]{0}', space=sflag, size = 0x4, scoped, tag = 'scoped memory for tpu_custom_call.1']
    #allocation7 [shape = 'u8[196608]{0}', space=vmem, size = 0x30000, scoped, tag = 'input window, operand 3, single buffered']
    #allocation8 [shape = 'u8[196608]{0}', space=vmem, size = 0x30000, scoped, tag = 'input window, operand 4, single buffered']
    #allocation9 [shape = 's32[1]{0}', space=sflag, size = 0x4, scoped, tag = 'scoped memory for tpu_custom_call.1']
    #allocation10 [shape = 'u8[196608]{0}', space=vmem, size = 0x30000, scoped, tag = 'input window, operand 5, single buffered']
    #allocation11 [shape = 'u8[65536]{0}', space=vmem, size = 0x10000, scoped, tag = 'input window, operand 6, single buffered']
    #allocation12 [shape = 's32[1]{0}', space=sflag, size = 0x4, scoped, tag = 'scoped memory for tpu_custom_call.1']
    #allocation13 [shape = 'u8[65536]{0}', space=vmem, size = 0x10000, scoped, tag = 'input window, operand 7, single buffered']
    #allocation14 [shape = 'u8[16384]{0}', space=vmem, size = 0x4000, scoped, tag = 'output window, operand 0, single buffered']
    %14 = vsyncpa [#allocation3], 0
    %15 = vsyncpa [#allocation6], 0
    %16 = vsyncpa [#allocation9], 0
    %17 = vsyncpa [#allocation12], 0
    %18 = vsyncpa [#allocation4], 0
    // Predicated region
    $region2: #{tpu_custom_call.1} parent=1 // pred_check
      _
    $region3: #{tpu_custom_call.1} parent=1 // pred_check_branch
      %20 = sbr.rel (0) target = $region5
    $region4: #{tpu_custom_call.1} parent=1 // pred_region
      %22 = vsyncadd [#allocation3], 0
      %s23 = sshll.u32 %s0, 4
      %s24 = int_to_ptr.hbm [resolvable:$true] %s23
      %s25 = sshll.u32 [#allocation2], 4
      %s26 = int_to_ptr.vmem [resolvable:$true] %s25
      %31 = dma.hbm_to_vmem [thread:$0]  %s24, 512, %s26, [#allocation3], 128, 128, 8
    $region5: #{tpu_custom_call.1} parent=1 // pred_fallthru
      _
    // Predicated region
    $region6: #{tpu_custom_call.1} parent=1 // pred_check
      _
    $region7: #{tpu_custom_call.1} parent=1 // pred_check_branch
      %33 = sbr.rel (0) target = $region9
    $region8: #{tpu_custom_call.1} parent=1 // pred_region
      %35 = vsyncadd [#allocation6], 0
      %s36 = sshll.u32 %s1, 4
      %s37 = int_to_ptr.hbm [resolvable:$true] %s36
      %s38 = sshll.u32 [#allocation5], 4
      %s39 = int_to_ptr.vmem [resolvable:$true] %s38
      %44 = dma.hbm_to_vmem [thread:$0]  %s37, 1024, %s39, [#allocation6], 128, 128, 8
    $region9: #{tpu_custom_call.1} parent=1 // pred_fallthru
      _
    // Predicated region
    $region10: #{tpu_custom_call.1} parent=1 // pred_check
      _
    $region11: #{tpu_custom_call.1} parent=1 // pred_check_branch
      %46 = sbr.rel (0) target = $region13
    $region12: #{tpu_custom_call.1} parent=1 // pred_region
      _
    $region13: #{tpu_custom_call.1} parent=1 // pred_fallthru
      _
    // Predicated region
    $region14: #{tpu_custom_call.1} parent=1 // pred_check
      _
    $region15: #{tpu_custom_call.1} parent=1 // pred_check_branch
      %48 = sbr.rel (0) target = $region17
    $region16: #{tpu_custom_call.1} parent=1 // pred_region
      %50 = vsyncadd [#allocation6], 0
      %s51 = sshll.u32 %s3, 4
      %s52 = int_to_ptr.hbm [resolvable:$true] %s51
      %s53 = sshll.u32 [#allocation7], 4
      %s54 = int_to_ptr.vmem [resolvable:$true] %s53
      %59 = dma.hbm_to_vmem [thread:$0]  %s52, 6144, %s54, [#allocation6], 128, 128, 8
    $region17: #{tpu_custom_call.1} parent=1 // pred_fallthru
      _
    // Predicated region
    $region18: #{tpu_custom_call.1} parent=1 // pred_check
      _
    $region19: #{tpu_custom_call.1} parent=1 // pred_check_branch
      %61 = sbr.rel (0) target = $region21
    $region20: #{tpu_custom_call.1} parent=1 // pred_region
      %63 = vsyncadd [#allocation9], 0
      %s64 = sshll.u32 %s4, 4
      %s65 = int_to_ptr.hbm [resolvable:$true] %s64
      %s66 = sshll.u32 [#allocation8], 4
      %s67 = int_to_ptr.vmem [resolvable:$true] %s66
      %72 = dma.hbm_to_vmem [thread:$0]  %s65, 6144, %s67, [#allocation9], 128, 128, 8
    $region21: #{tpu_custom_call.1} parent=1 // pred_fallthru
      _
    // Predicated region
    $region22: #{tpu_custom_call.1} parent=1 // pred_check
      _
    $region23: #{tpu_custom_call.1} parent=1 // pred_check_branch
      %74 = sbr.rel (0) target = $region25
    $region24: #{tpu_custom_call.1} parent=1 // pred_region
      %76 = vsyncadd [#allocation9], 0
      %s77 = sshll.u32 %s5, 4
      %s78 = int_to_ptr.hbm [resolvable:$true] %s77
      %s79 = sshll.u32 [#allocation10], 4
      %s80 = int_to_ptr.vmem [resolvable:$true] %s79
      %85 = dma.hbm_to_vmem [thread:$0]  %s78, 6144, %s80, [#allocation9], 128, 128, 8
    $region25: #{tpu_custom_call.1} parent=1 // pred_fallthru
      _
    // Predicated region
    $region26: #{tpu_custom_call.1} parent=1 // pred_check
      _
    $region27: #{tpu_custom_call.1} parent=1 // pred_check_branch
      %87 = sbr.rel (0) target = $region29
    $region28: #{tpu_custom_call.1} parent=1 // pred_region
      %89 = vsyncadd [#allocation12], 0
      %s90 = sshll.u32 %s6, 4
      %s91 = int_to_ptr.hbm [resolvable:$true] %s90
      %s92 = sshll.u32 [#allocation11], 4
      %s93 = int_to_ptr.vmem [resolvable:$true] %s92
      %98 = dma.hbm_to_vmem [thread:$0]  %s91, 2048, %s93, [#allocation12], 128, 128, 8
    $region29: #{tpu_custom_call.1} parent=1 // pred_fallthru
      _
    // Predicated region
    $region30: #{tpu_custom_call.1} parent=1 // pred_check
      _
    $region31: #{tpu_custom_call.1} parent=1 // pred_check_branch
      %100 = sbr.rel (0) target = $region33
    $region32: #{tpu_custom_call.1} parent=1 // pred_region
      %102 = vsyncadd [#allocation12], 0
      %s103 = sshll.u32 %s7, 4
      %s104 = int_to_ptr.hbm [resolvable:$true] %s103
      %s105 = sshll.u32 [#allocation13], 4
      %s106 = int_to_ptr.vmem [resolvable:$true] %s105
      %111 = dma.hbm_to_vmem [thread:$0]  %s104, 2048, %s106, [#allocation12], 128, 128, 8
    $region33: #{tpu_custom_call.1} parent=1 // pred_fallthru
      _
    // Predicated region
    $region34: #{tpu_custom_call.1} parent=1 // pred_check
      _
    $region35: #{tpu_custom_call.1} parent=1 // pred_check_branch
      %113 = sbr.rel (0) target = $region37
    $region36: #{tpu_custom_call.1} parent=1 // pred_region
      _
    $region37: #{tpu_custom_call.1} parent=1 // pred_fallthru
      _
    // Predicated region
    $region38: #{tpu_custom_call.1} parent=1 // pred_check
      _
    $region39: #{tpu_custom_call.1} parent=1 // pred_check_branch
      %115 = sbr.rel (0) target = $region41
    $region40: #{tpu_custom_call.1} parent=1 // pred_region
      %117 = dma.done [#allocation3], 512
    $region41: #{tpu_custom_call.1} parent=1 // pred_fallthru
      _
    // Predicated region
    $region42: #{tpu_custom_call.1} parent=1 // pred_check
      _
    $region43: #{tpu_custom_call.1} parent=1 // pred_check_branch
      %119 = sbr.rel (0) target = $region45
    $region44: #{tpu_custom_call.1} parent=1 // pred_region
      %121 = dma.done [#allocation6], 1024
    $region45: #{tpu_custom_call.1} parent=1 // pred_fallthru
      _
    // Predicated region
    $region46: #{tpu_custom_call.1} parent=1 // pred_check
      _
    $region47: #{tpu_custom_call.1} parent=1 // pred_check_branch
      %123 = sbr.rel (0) target = $region49
    $region48: #{tpu_custom_call.1} parent=1 // pred_region
      %125 = dma.done [#allocation6], 6144
    $region49: #{tpu_custom_call.1} parent=1 // pred_fallthru
      _
    // Predicated region
    $region50: #{tpu_custom_call.1} parent=1 // pred_check
      _
    $region51: #{tpu_custom_call.1} parent=1 // pred_check_branch
      %127 = sbr.rel (0) target = $region53
    $region52: #{tpu_custom_call.1} parent=1 // pred_region
      %129 = dma.done [#allocation9], 6144
    $region53: #{tpu_custom_call.1} parent=1 // pred_fallthru
      _
    // Predicated region
    $region54: #{tpu_custom_call.1} parent=1 // pred_check
      _
    $region55: #{tpu_custom_call.1} parent=1 // pred_check_branch
      %131 = sbr.rel (0) target = $region57
    $region56: #{tpu_custom_call.1} parent=1 // pred_region
      %133 = dma.done [#allocation9], 6144
    $region57: #{tpu_custom_call.1} parent=1 // pred_fallthru
      _
    // Predicated region
    $region58: #{tpu_custom_call.1} parent=1 // pred_check
      _
    $region59: #{tpu_custom_call.1} parent=1 // pred_check_branch
      %135 = sbr.rel (0) target = $region61
    $region60: #{tpu_custom_call.1} parent=1 // pred_region
      %137 = dma.done [#allocation12], 2048
    $region61: #{tpu_custom_call.1} parent=1 // pred_fallthru
      _
    // Predicated region
    $region62: #{tpu_custom_call.1} parent=1 // pred_check
      _
    $region63: #{tpu_custom_call.1} parent=1 // pred_check_branch
      %139 = sbr.rel (0) target = $region65
    $region64: #{tpu_custom_call.1} parent=1 // pred_region
      %141 = dma.done [#allocation12], 2048
    $region65: #{tpu_custom_call.1} parent=1 // pred_fallthru
      _
    %v142 = vld [vmem:[#allocation2] sm:$0xff]
    %v143 = vld [vmem:[#allocation2 + $0x8] sm:$0xff]
    %v144 = vld [vmem:[#allocation2 + $0x10] sm:$0xff]
    %v145 = vld [vmem:[#allocation2 + $0x18] sm:$0xff]
    %v146 = vld [vmem:[#allocation5] sm:$0xff]
    %v147 = vld [vmem:[#allocation5 + $0x8] sm:$0xff]
    %v148 = vld [vmem:[#allocation5 + $0x10] sm:$0xff]
    %v149 = vld [vmem:[#allocation5 + $0x18] sm:$0xff]
    %v150 = vld [vmem:[#allocation5 + $0x20] sm:$0xff]
    %v151 = vld [vmem:[#allocation5 + $0x28] sm:$0xff]
    %v152 = vld [vmem:[#allocation5 + $0x30] sm:$0xff]
    %v153 = vld [vmem:[#allocation5 + $0x38] sm:$0xff]
    %v154 = vld [vmem:[%s2] sm:$0x1]
    %v156 = vperm.slane %v154, 0
    %vm158 = vcmask 523264
    %v160 = vsel %vm158, %v142, 0
    %v163 = vsel %vm158, %v143, 0
    %v166 = vsel %vm158, %v144, 0
    %v169 = vsel %vm158, %v145, 0
    %171 = vmatpush.msra.mxu0 0.0
    %172 = vmatpush.msra.mxu0 0.0
    %173 = vmatpush.msra.mxu0 0.0
    %174 = vmatpush.msra.mxu0 0.0
    %175 = vmatpush.msra.mxu0 0.0
    %176 = vmatpush.msra.mxu0 0.0
    %177 = vmatpush.msra.mxu0 0.0
    %178 = vmatpush.msra.mxu0 0.0
    %179 = vmatpush.msra.mxu0 %v153
    %180 = vmatpush.msra.mxu0 %v152
    %181 = vmatpush.msra.mxu0 %v151
    %182 = vmatpush.msra.mxu0 %v150
    %183 = vmatpush.msra.mxu0 %v149
    %184 = vmatpush.msra.mxu0 %v148
    %185 = vmatpush.msra.mxu0 %v147
    %186 = vmatpush.msra.mxu0 %v146
    %187 = vmatmul.f32.gmra.mxu0 %v160
    %v188 = vpop.f32.mrf.mxu0
    %v189 = vadd.f32 %v156, %v188
    %190 = vmatmul.f32.gmra.mxu0 %v163
    %v191 = vpop.f32.mrf.mxu0
    %v192 = vadd.f32 %v156, %v191
    %193 = vmatmul.f32.gmra.mxu0 %v166
    %v194 = vpop.f32.mrf.mxu0
    %v195 = vadd.f32 %v156, %v194
    %196 = vmatmul.f32.gmra.mxu0 %v169
    %v197 = vpop.f32.mrf.mxu0
    %v198 = vadd.f32 %v156, %v197
    %199 = vdwg.mxu0
    %v200 = vlaneseq
    %v201 = vshrl.u32 %v200, 7
    %v202 = vadd.s32 %v201, 8
    %v203 = vadd.s32 %v201, 16
    %v204 = vadd.s32 %v201, 24
    %vm205 = vcmp.lt.s32.totalorder %v201, 0
    %v206 = vsub.s32 0, %v201
    %v207 = vsel %vm205, %v206, %v201
    %v208 = vshrl.u32 %v207, 4
    %v209 = vand.u32 %v207, 15
    %v210 = vsub.s32 0, %v209
    %v211 = vsel %vm205, %v210, %v209
    %vm212 = vcmp.lt.s32.totalorder %v202, 0
    %v213 = vsub.s32 0, %v202
    %v214 = vsel %vm212, %v213, %v202
    %v215 = vshrl.u32 %v214, 4
    %v216 = vand.u32 %v214, 15
    %v217 = vsub.s32 0, %v216
    %v218 = vsel %vm212, %v217, %v216
    %vm219 = vcmp.lt.s32.totalorder %v203, 0
    %v220 = vsub.s32 0, %v203
    %v221 = vsel %vm219, %v220, %v203
    %v222 = vshrl.u32 %v221, 4
    %v223 = vand.u32 %v221, 15
    %v224 = vsub.s32 0, %v223
    %v225 = vsel %vm219, %v224, %v223
    %vm226 = vcmp.lt.s32.totalorder %v204, 0
    %v227 = vsub.s32 0, %v204
    %v228 = vsel %vm226, %v227, %v204
    %v229 = vshrl.u32 %v228, 4
    %v230 = vand.u32 %v228, 15
    %v231 = vsub.s32 0, %v230
    %v232 = vsel %vm226, %v231, %v230
    %vm233 = vcmp.ne.s32.totalorder %v211, 0
    %vm234 = vcmp.ne.s32.totalorder %v218, 0
    %vm235 = vcmp.ne.s32.totalorder %v225, 0
    %vm236 = vcmp.ne.s32.totalorder %v232, 0
    %vm237 = vcmp.lt.s32.totalorder %v211, 0
    %vm238 = vcmp.lt.s32.totalorder %v218, 0
    %vm239 = vcmp.lt.s32.totalorder %v225, 0
    %vm240 = vcmp.lt.s32.totalorder %v232, 0
    %vm241 = vmand %vm237, %vm233
    %vm242 = vmand %vm238, %vm234
    %vm243 = vmand %vm239, %vm235
    %vm244 = vmand %vm240, %vm236
    %v245 = vadd.s32 %v211, 16
    %v246 = vadd.s32 %v218, 16
    %v247 = vadd.s32 %v225, 16
    %v248 = vadd.s32 %v232, 16
    %v249 = vsel %vm241, %v245, %v211
    %v250 = vsel %vm242, %v246, %v218
    %v251 = vsel %vm243, %v247, %v225
    %v252 = vsel %vm244, %v248, %v232
    %v253 = vrot.slane %v189, 5
    %v254 = vrot.slane %v192, 5
    %v255 = vrot.slane %v195, 5
    %v256 = vrot.slane %v198, 5
    %vm257 = vcmp.lt.s32.totalorder %v201, 3
    %v258 = vsel %vm257, %v255, %v256
    %v259 = vsel %vm257, %v254, %v255
    %v260 = vsel %vm257, %v253, %v254
    %v261 = vsel %vm257, %v256, %v253
    %v262 = vadd.s32 %v249, 4294967293
    %v263 = vadd.s32 %v250, 4294967293
    %v264 = vadd.s32 %v251, 4294967293
    %v265 = vadd.s32 %v252, 4294967293
    %vm266 = vcmp.ge.s32.totalorder %v262, 0
    %vm267 = vcmp.ge.s32.totalorder %v263, 0
    %vm268 = vcmp.ge.s32.totalorder %v264, 0
    %vm269 = vcmp.ge.s32.totalorder %v265, 0
    %vm270 = vcmp.lt.s32.totalorder %v262, 16
    %vm271 = vcmp.lt.s32.totalorder %v263, 16
    %vm272 = vcmp.lt.s32.totalorder %v264, 16
    %vm273 = vcmp.lt.s32.totalorder %v265, 16
    %vm274 = vmand %vm266, %vm270
    %vm275 = vmand %vm267, %vm271
    %vm276 = vmand %vm268, %vm272
    %vm277 = vmand %vm269, %vm273
    %v278 = vsel %vm274, 1, 0
    %v279 = vsel %vm275, 1, 0
    %v280 = vsel %vm276, 1, 0
    %v281 = vsel %vm277, 1, 0
    %vm282 = vcmp.eq.s32.totalorder %v278, 1
    %vm283 = vcmp.eq.s32.totalorder %v279, 1
    %vm284 = vcmp.eq.s32.totalorder %v280, 1
    %vm285 = vcmp.eq.s32.totalorder %v281, 1
    %v286 = vsel %vm282, %v261, 0.0
    %v287 = vsel %vm283, %v260, 0.0
    %v288 = vsel %vm284, %v259, 0.0
    %v289 = vsel %vm285, %v258, 0.0
    %v290 = vrot.slane %v189, 3
    %v291 = vrot.slane %v192, 3
    %v292 = vrot.slane %v195, 3
    %v293 = vrot.slane %v198, 3
    %vm294 = vcmp.lt.s32.totalorder %v201, 5
    %v295 = vsel %vm294, %v292, %v293
    %v296 = vsel %vm294, %v291, %v292
    %v297 = vsel %vm294, %v290, %v291
    %v298 = vsel %vm294, %v293, %v290
    %v299 = vadd.s32 %v249, 3
    %v300 = vadd.s32 %v250, 3
    %v301 = vadd.s32 %v251, 3
    %v302 = vadd.s32 %v252, 3
    %vm303 = vcmp.ge.s32.totalorder %v299, 0
    %vm304 = vcmp.ge.s32.totalorder %v300, 0
    %vm305 = vcmp.ge.s32.totalorder %v301, 0
    %vm306 = vcmp.ge.s32.totalorder %v302, 0
    %vm307 = vcmp.lt.s32.totalorder %v299, 16
    %vm308 = vcmp.lt.s32.totalorder %v300, 16
    %vm309 = vcmp.lt.s32.totalorder %v301, 16
    %vm310 = vcmp.lt.s32.totalorder %v302, 16
    %vm311 = vmand %vm303, %vm307
    %vm312 = vmand %vm304, %vm308
    %vm313 = vmand %vm305, %vm309
    %vm314 = vmand %vm306, %vm310
    %v315 = vsel %vm311, 1, 0
    %v316 = vsel %vm312, 1, 0
    %v317 = vsel %vm313, 1, 0
    %v318 = vsel %vm314, 1, 0
    %vm319 = vcmp.eq.s32.totalorder %v315, 1
    %vm320 = vcmp.eq.s32.totalorder %v316, 1
    %vm321 = vcmp.eq.s32.totalorder %v317, 1
    %vm322 = vcmp.eq.s32.totalorder %v318, 1
    %v323 = vsel %vm319, %v297, 0.0
    %v324 = vsel %vm320, %v296, 0.0
    %v325 = vsel %vm321, %v295, 0.0
    %v326 = vsel %vm322, %v298, 0.0
    %v327 = vld [vmem:[#allocation7] sm:$0xff]
    %v328 = vld [vmem:[#allocation7 + $0x8] sm:$0xff]
    %v329 = vld [vmem:[#allocation7 + $0x10] sm:$0xff]
    %v330 = vld [vmem:[#allocation7 + $0x18] sm:$0xff]
    %v331 = vld [vmem:[#allocation7 + $0x20] sm:$0xff]
    %v332 = vld [vmem:[#allocation7 + $0x28] sm:$0xff]
    %v333 = vld [vmem:[#allocation7 + $0x30] sm:$0xff]
    %v334 = vld [vmem:[#allocation7 + $0x38] sm:$0xff]
    %v335 = vld [vmem:[#allocation7 + $0x40] sm:$0xff]
    %v336 = vld [vmem:[#allocation7 + $0x48] sm:$0xff]
    %v337 = vld [vmem:[#allocation7 + $0x50] sm:$0xff]
    %v338 = vld [vmem:[#allocation7 + $0x58] sm:$0xff]
    %v339 = vld [vmem:[#allocation7 + $0x60] sm:$0xff]
    %v340 = vld [vmem:[#allocation7 + $0x68] sm:$0xff]
    %v341 = vld [vmem:[#allocation7 + $0x70] sm:$0xff]
    %v342 = vld [vmem:[#allocation7 + $0x78] sm:$0xff]
    %v343 = vld [vmem:[#allocation7 + $0x80] sm:$0xff]
    %v344 = vld [vmem:[#allocation7 + $0x88] sm:$0xff]
    %v345 = vld [vmem:[#allocation7 + $0x90] sm:$0xff]
    %v346 = vld [vmem:[#allocation7 + $0x98] sm:$0xff]
    %v347 = vld [vmem:[#allocation7 + $0xa0] sm:$0xff]
    %v348 = vld [vmem:[#allocation7 + $0xa8] sm:$0xff]
    %v349 = vld [vmem:[#allocation7 + $0xb0] sm:$0xff]
    %v350 = vld [vmem:[#allocation7 + $0xb8] sm:$0xff]
    %v351 = vld [vmem:[#allocation7 + $0xc0] sm:$0xff]
    %v352 = vld [vmem:[#allocation7 + $0xc8] sm:$0xff]
    %v353 = vld [vmem:[#allocation7 + $0xd0] sm:$0xff]
    %v354 = vld [vmem:[#allocation7 + $0xd8] sm:$0xff]
    %v355 = vld [vmem:[#allocation7 + $0xe0] sm:$0xff]
    %v356 = vld [vmem:[#allocation7 + $0xe8] sm:$0xff]
    %v357 = vld [vmem:[#allocation7 + $0xf0] sm:$0xff]
    %v358 = vld [vmem:[#allocation7 + $0xf8] sm:$0xff]
    %v359 = vld [vmem:[#allocation7 + $0x100] sm:$0xff]
    %v360 = vld [vmem:[#allocation7 + $0x108] sm:$0xff]
    %v361 = vld [vmem:[#allocation7 + $0x110] sm:$0xff]
    %v362 = vld [vmem:[#allocation7 + $0x118] sm:$0xff]
    %v363 = vld [vmem:[#allocation7 + $0x120] sm:$0xff]
    %v364 = vld [vmem:[#allocation7 + $0x128] sm:$0xff]
    %v365 = vld [vmem:[#allocation7 + $0x130] sm:$0xff]
    %v366 = vld [vmem:[#allocation7 + $0x138] sm:$0xff]
    %v367 = vld [vmem:[#allocation7 + $0x140] sm:$0xff]
    %v368 = vld [vmem:[#allocation7 + $0x148] sm:$0xff]
    %v369 = vld [vmem:[#allocation7 + $0x150] sm:$0xff]
    %v370 = vld [vmem:[#allocation7 + $0x158] sm:$0xff]
    %v371 = vld [vmem:[#allocation7 + $0x160] sm:$0xff]
    %v372 = vld [vmem:[#allocation7 + $0x168] sm:$0xff]
    %v373 = vld [vmem:[#allocation7 + $0x170] sm:$0xff]
    %v374 = vld [vmem:[#allocation7 + $0x178] sm:$0xff]
    %v375 = vld [vmem:[%s8] sm:$0x1]
    %v377 = vperm.slane %v375, 0
    %379 = vmatpush.msra.mxu0 %v342
    %380 = vmatpush.msra.mxu0 %v341
    %381 = vmatpush.msra.mxu0 %v340
    %382 = vmatpush.msra.mxu0 %v339
    %383 = vmatpush.msra.mxu0 %v338
    %384 = vmatpush.msra.mxu0 %v337
    %385 = vmatpush.msra.mxu0 %v336
    %386 = vmatpush.msra.mxu0 %v335
    %387 = vmatpush.msra.mxu0 %v334
    %388 = vmatpush.msra.mxu0 %v333
    %389 = vmatpush.msra.mxu0 %v332
    %390 = vmatpush.msra.mxu0 %v331
    %391 = vmatpush.msra.mxu0 %v330
    %392 = vmatpush.msra.mxu0 %v329
    %393 = vmatpush.msra.mxu0 %v328
    %394 = vmatpush.msra.mxu0 %v327
    %395 = vmatmul.f32.gmra.mxu0 %v286
    %v396 = vpop.f32.mrf.mxu0
    %v397 = vadd.f32 %v377, %v396
    %398 = vmatmul.f32.gmra.mxu0 %v287
    %v399 = vpop.f32.mrf.mxu0
    %v400 = vadd.f32 %v377, %v399
    %401 = vmatmul.f32.gmra.mxu0 %v288
    %v402 = vpop.f32.mrf.mxu0
    %v403 = vadd.f32 %v377, %v402
    %404 = vmatmul.f32.gmra.mxu0 %v289
    %v405 = vpop.f32.mrf.mxu0
    %v406 = vadd.f32 %v377, %v405
    %407 = vdwg.mxu0
    %408 = vmatpush.msra.mxu0 %v358
    %409 = vmatpush.msra.mxu0 %v357
    %410 = vmatpush.msra.mxu0 %v356
    %411 = vmatpush.msra.mxu0 %v355
    %412 = vmatpush.msra.mxu0 %v354
    %413 = vmatpush.msra.mxu0 %v353
    %414 = vmatpush.msra.mxu0 %v352
    %415 = vmatpush.msra.mxu0 %v351
    %416 = vmatpush.msra.mxu0 %v350
    %417 = vmatpush.msra.mxu0 %v349
    %418 = vmatpush.msra.mxu0 %v348
    %419 = vmatpush.msra.mxu0 %v347
    %420 = vmatpush.msra.mxu0 %v346
    %421 = vmatpush.msra.mxu0 %v345
    %422 = vmatpush.msra.mxu0 %v344
    %423 = vmatpush.msra.mxu0 %v343
    %424 = vmatmul.f32.gmra.mxu0 %v189
    %v425 = vpop.f32.mrf.mxu0
    %v426 = vadd.f32 %v397, %v425
    %427 = vmatmul.f32.gmra.mxu0 %v192
    %v428 = vpop.f32.mrf.mxu0
    %v429 = vadd.f32 %v400, %v428
    %430 = vmatmul.f32.gmra.mxu0 %v195
    %v431 = vpop.f32.mrf.mxu0
    %v432 = vadd.f32 %v403, %v431
    %433 = vmatmul.f32.gmra.mxu0 %v198
    %v434 = vpop.f32.mrf.mxu0
    %v435 = vadd.f32 %v406, %v434
    %436 = vdwg.mxu0
    %437 = vmatpush.msra.mxu0 %v374
    %438 = vmatpush.msra.mxu0 %v373
    %439 = vmatpush.msra.mxu0 %v372
    %440 = vmatpush.msra.mxu0 %v371
    %441 = vmatpush.msra.mxu0 %v370
    %442 = vmatpush.msra.mxu0 %v369
    %443 = vmatpush.msra.mxu0 %v368
    %444 = vmatpush.msra.mxu0 %v367
    %445 = vmatpush.msra.mxu0 %v366
    %446 = vmatpush.msra.mxu0 %v365
    %447 = vmatpush.msra.mxu0 %v364
    %448 = vmatpush.msra.mxu0 %v363
    %449 = vmatpush.msra.mxu0 %v362
    %450 = vmatpush.msra.mxu0 %v361
    %451 = vmatpush.msra.mxu0 %v360
    %452 = vmatpush.msra.mxu0 %v359
    %453 = vmatmul.f32.gmra.mxu0 %v323
    %v454 = vpop.f32.mrf.mxu0
    %v455 = vadd.f32 %v426, %v454
    %456 = vmatmul.f32.gmra.mxu0 %v324
    %v457 = vpop.f32.mrf.mxu0
    %v458 = vadd.f32 %v429, %v457
    %459 = vmatmul.f32.gmra.mxu0 %v325
    %v460 = vpop.f32.mrf.mxu0
    %v461 = vadd.f32 %v432, %v460
    %462 = vmatmul.f32.gmra.mxu0 %v326
    %v463 = vpop.f32.mrf.mxu0
    %v464 = vadd.f32 %v435, %v463
    %465 = vdwg.mxu0
    %v466 = vmax.f32 %v455, 0.0
    %v467 = vmax.f32 %v458, 0.0
    %v468 = vmax.f32 %v461, 0.0
    %v469 = vmax.f32 %v464, 0.0
    %v470 = vadd.f32 %v466, %v189
    %v471 = vadd.f32 %v467, %v192
    %v472 = vadd.f32 %v468, %v195
    %v473 = vadd.f32 %v469, %v198
    %v474 = vadd.f32 %v189, %v470
    %v475 = vadd.f32 %v192, %v471
    %v476 = vadd.f32 %v195, %v472
    %v477 = vadd.f32 %v198, %v473
    %v478 = vrot.slane %v470, 2
    %v479 = vrot.slane %v471, 2
    %v480 = vrot.slane %v472, 2
    %v481 = vrot.slane %v473, 2
    %vm482 = vcmp.lt.s32.totalorder %v201, 6
    %v483 = vsel %vm482, %v480, %v481
    %v484 = vsel %vm482, %v479, %v480
    %v485 = vsel %vm482, %v478, %v479
    %v486 = vsel %vm482, %v481, %v478
    %v487 = vadd.s32 %v249, 4294967290
    %v488 = vadd.s32 %v250, 4294967290
    %v489 = vadd.s32 %v251, 4294967290
    %v490 = vadd.s32 %v252, 4294967290
    %vm491 = vcmp.ge.s32.totalorder %v487, 0
    %vm492 = vcmp.ge.s32.totalorder %v488, 0
    %vm493 = vcmp.ge.s32.totalorder %v489, 0
    %vm494 = vcmp.ge.s32.totalorder %v490, 0
    %vm495 = vcmp.lt.s32.totalorder %v487, 16
    %vm496 = vcmp.lt.s32.totalorder %v488, 16
    %vm497 = vcmp.lt.s32.totalorder %v489, 16
    %vm498 = vcmp.lt.s32.totalorder %v490, 16
    %vm499 = vmand %vm491, %vm495
    %vm500 = vmand %vm492, %vm496
    %vm501 = vmand %vm493, %vm497
    %vm502 = vmand %vm494, %vm498
    %v503 = vsel %vm499, 1, 0
    %v504 = vsel %vm500, 1, 0
    %v505 = vsel %vm501, 1, 0
    %v506 = vsel %vm502, 1, 0
    %vm507 = vcmp.eq.s32.totalorder %v503, 1
    %vm508 = vcmp.eq.s32.totalorder %v504, 1
    %vm509 = vcmp.eq.s32.totalorder %v505, 1
    %vm510 = vcmp.eq.s32.totalorder %v506, 1
    %v511 = vsel %vm507, %v486, 0.0
    %v512 = vsel %vm508, %v485, 0.0
    %v513 = vsel %vm509, %v484, 0.0
    %v514 = vsel %vm510, %v483, 0.0
    %v515 = vrot.slane %v470, 6
    %v516 = vrot.slane %v471, 6
    %v517 = vrot.slane %v472, 6
    %v518 = vrot.slane %v473, 6
    %vm519 = vcmp.lt.s32.totalorder %v201, 2
    %v520 = vsel %vm519, %v517, %v518
    %v521 = vsel %vm519, %v516, %v517
    %v522 = vsel %vm519, %v515, %v516
    %v523 = vsel %vm519, %v518, %v515
    %v524 = vadd.s32 %v249, 6
    %v525 = vadd.s32 %v250, 6
    %v526 = vadd.s32 %v251, 6
    %v527 = vadd.s32 %v252, 6
    %vm528 = vcmp.ge.s32.totalorder %v524, 0
    %vm529 = vcmp.ge.s32.totalorder %v525, 0
    %vm530 = vcmp.ge.s32.totalorder %v526, 0
    %vm531 = vcmp.ge.s32.totalorder %v527, 0
    %vm532 = vcmp.lt.s32.totalorder %v524, 16
    %vm533 = vcmp.lt.s32.totalorder %v525, 16
    %vm534 = vcmp.lt.s32.totalorder %v526, 16
    %vm535 = vcmp.lt.s32.totalorder %v527, 16
    %vm536 = vmand %vm528, %vm532
    %vm537 = vmand %vm529, %vm533
    %vm538 = vmand %vm530, %vm534
    %vm539 = vmand %vm531, %vm535
    %v540 = vsel %vm536, 1, 0
    %v541 = vsel %vm537, 1, 0
    %v542 = vsel %vm538, 1, 0
    %v543 = vsel %vm539, 1, 0
    %vm544 = vcmp.eq.s32.totalorder %v540, 1
    %vm545 = vcmp.eq.s32.totalorder %v541, 1
    %vm546 = vcmp.eq.s32.totalorder %v542, 1
    %vm547 = vcmp.eq.s32.totalorder %v543, 1
    %v548 = vsel %vm544, %v522, 0.0
    %v549 = vsel %vm545, %v521, 0.0
    %v550 = vsel %vm546, %v520, 0.0
    %v551 = vsel %vm547, %v523, 0.0
    %v552 = vld [vmem:[#allocation8] sm:$0xff]
    %v553 = vld [vmem:[#allocation8 + $0x8] sm:$0xff]
    %v554 = vld [vmem:[#allocation8 + $0x10] sm:$0xff]
    %v555 = vld [vmem:[#allocation8 + $0x18] sm:$0xff]
    %v556 = vld [vmem:[#allocation8 + $0x20] sm:$0xff]
    %v557 = vld [vmem:[#allocation8 + $0x28] sm:$0xff]
    %v558 = vld [vmem:[#allocation8 + $0x30] sm:$0xff]
    %v559 = vld [vmem:[#allocation8 + $0x38] sm:$0xff]
    %v560 = vld [vmem:[#allocation8 + $0x40] sm:$0xff]
    %v561 = vld [vmem:[#allocation8 + $0x48] sm:$0xff]
    %v562 = vld [vmem:[#allocation8 + $0x50] sm:$0xff]
    %v563 = vld [vmem:[#allocation8 + $0x58] sm:$0xff]
    %v564 = vld [vmem:[#allocation8 + $0x60] sm:$0xff]
    %v565 = vld [vmem:[#allocation8 + $0x68] sm:$0xff]
    %v566 = vld [vmem:[#allocation8 + $0x70] sm:$0xff]
    %v567 = vld [vmem:[#allocation8 + $0x78] sm:$0xff]
    %v568 = vld [vmem:[#allocation8 + $0x80] sm:$0xff]
    %v569 = vld [vmem:[#allocation8 + $0x88] sm:$0xff]
    %v570 = vld [vmem:[#allocation8 + $0x90] sm:$0xff]
    %v571 = vld [vmem:[#allocation8 + $0x98] sm:$0xff]
    %v572 = vld [vmem:[#allocation8 + $0xa0] sm:$0xff]
    %v573 = vld [vmem:[#allocation8 + $0xa8] sm:$0xff]
    %v574 = vld [vmem:[#allocation8 + $0xb0] sm:$0xff]
    %v575 = vld [vmem:[#allocation8 + $0xb8] sm:$0xff]
    %v576 = vld [vmem:[#allocation8 + $0xc0] sm:$0xff]
    %v577 = vld [vmem:[#allocation8 + $0xc8] sm:$0xff]
    %v578 = vld [vmem:[#allocation8 + $0xd0] sm:$0xff]
    %v579 = vld [vmem:[#allocation8 + $0xd8] sm:$0xff]
    %v580 = vld [vmem:[#allocation8 + $0xe0] sm:$0xff]
    %v581 = vld [vmem:[#allocation8 + $0xe8] sm:$0xff]
    %v582 = vld [vmem:[#allocation8 + $0xf0] sm:$0xff]
    %v583 = vld [vmem:[#allocation8 + $0xf8] sm:$0xff]
    %v584 = vld [vmem:[#allocation8 + $0x100] sm:$0xff]
    %v585 = vld [vmem:[#allocation8 + $0x108] sm:$0xff]
    %v586 = vld [vmem:[#allocation8 + $0x110] sm:$0xff]
    %v587 = vld [vmem:[#allocation8 + $0x118] sm:$0xff]
    %v588 = vld [vmem:[#allocation8 + $0x120] sm:$0xff]
    %v589 = vld [vmem:[#allocation8 + $0x128] sm:$0xff]
    %v590 = vld [vmem:[#allocation8 + $0x130] sm:$0xff]
    %v591 = vld [vmem:[#allocation8 + $0x138] sm:$0xff]
    %v592 = vld [vmem:[#allocation8 + $0x140] sm:$0xff]
    %v593 = vld [vmem:[#allocation8 + $0x148] sm:$0xff]
    %v594 = vld [vmem:[#allocation8 + $0x150] sm:$0xff]
    %v595 = vld [vmem:[#allocation8 + $0x158] sm:$0xff]
    %v596 = vld [vmem:[#allocation8 + $0x160] sm:$0xff]
    %v597 = vld [vmem:[#allocation8 + $0x168] sm:$0xff]
    %v598 = vld [vmem:[#allocation8 + $0x170] sm:$0xff]
    %v599 = vld [vmem:[#allocation8 + $0x178] sm:$0xff]
    %s600 = scalar_lea.vmem %s8, 1
    %v601 = vld [vmem:[%s600] sm:$0x1]
    %v603 = vperm.slane %v601, 0
    %605 = vmatpush.msra.mxu0 %v567
    %606 = vmatpush.msra.mxu0 %v566
    %607 = vmatpush.msra.mxu0 %v565
    %608 = vmatpush.msra.mxu0 %v564
    %609 = vmatpush.msra.mxu0 %v563
    %610 = vmatpush.msra.mxu0 %v562
    %611 = vmatpush.msra.mxu0 %v561
    %612 = vmatpush.msra.mxu0 %v560
    %613 = vmatpush.msra.mxu0 %v559
    %614 = vmatpush.msra.mxu0 %v558
    %615 = vmatpush.msra.mxu0 %v557
    %616 = vmatpush.msra.mxu0 %v556
    %617 = vmatpush.msra.mxu0 %v555
    %618 = vmatpush.msra.mxu0 %v554
    %619 = vmatpush.msra.mxu0 %v553
    %620 = vmatpush.msra.mxu0 %v552
    %621 = vmatmul.f32.gmra.mxu0 %v511
    %v622 = vpop.f32.mrf.mxu0
    %v623 = vadd.f32 %v603, %v622
    %624 = vmatmul.f32.gmra.mxu0 %v512
    %v625 = vpop.f32.mrf.mxu0
    %v626 = vadd.f32 %v603, %v625
    %627 = vmatmul.f32.gmra.mxu0 %v513
    %v628 = vpop.f32.mrf.mxu0
    %v629 = vadd.f32 %v603, %v628
    %630 = vmatmul.f32.gmra.mxu0 %v514
    %v631 = vpop.f32.mrf.mxu0
    %v632 = vadd.f32 %v603, %v631
    %633 = vdwg.mxu0
    %634 = vmatpush.msra.mxu0 %v583
    %635 = vmatpush.msra.mxu0 %v582
    %636 = vmatpush.msra.mxu0 %v581
    %637 = vmatpush.msra.mxu0 %v580
    %638 = vmatpush.msra.mxu0 %v579
    %639 = vmatpush.msra.mxu0 %v578
    %640 = vmatpush.msra.mxu0 %v577
    %641 = vmatpush.msra.mxu0 %v576
    %642 = vmatpush.msra.mxu0 %v575
    %643 = vmatpush.msra.mxu0 %v574
    %644 = vmatpush.msra.mxu0 %v573
    %645 = vmatpush.msra.mxu0 %v572
    %646 = vmatpush.msra.mxu0 %v571
    %647 = vmatpush.msra.mxu0 %v570
    %648 = vmatpush.msra.mxu0 %v569
    %649 = vmatpush.msra.mxu0 %v568
    %650 = vmatmul.f32.gmra.mxu0 %v470
    %v651 = vpop.f32.mrf.mxu0
    %v652 = vadd.f32 %v623, %v651
    %653 = vmatmul.f32.gmra.mxu0 %v471
    %v654 = vpop.f32.mrf.mxu0
    %v655 = vadd.f32 %v626, %v654
    %656 = vmatmul.f32.gmra.mxu0 %v472
    %v657 = vpop.f32.mrf.mxu0
    %v658 = vadd.f32 %v629, %v657
    %659 = vmatmul.f32.gmra.mxu0 %v473
    %v660 = vpop.f32.mrf.mxu0
    %v661 = vadd.f32 %v632, %v660
    %662 = vdwg.mxu0
    %663 = vmatpush.msra.mxu0 %v599
    %664 = vmatpush.msra.mxu0 %v598
    %665 = vmatpush.msra.mxu0 %v597
    %666 = vmatpush.msra.mxu0 %v596
    %667 = vmatpush.msra.mxu0 %v595
    %668 = vmatpush.msra.mxu0 %v594
    %669 = vmatpush.msra.mxu0 %v593
    %670 = vmatpush.msra.mxu0 %v592
    %671 = vmatpush.msra.mxu0 %v591
    %672 = vmatpush.msra.mxu0 %v590
    %673 = vmatpush.msra.mxu0 %v589
    %674 = vmatpush.msra.mxu0 %v588
    %675 = vmatpush.msra.mxu0 %v587
    %676 = vmatpush.msra.mxu0 %v586
    %677 = vmatpush.msra.mxu0 %v585
    %678 = vmatpush.msra.mxu0 %v584
    %679 = vmatmul.f32.gmra.mxu0 %v548
    %v680 = vpop.f32.mrf.mxu0
    %v681 = vadd.f32 %v652, %v680
    %682 = vmatmul.f32.gmra.mxu0 %v549
    %v683 = vpop.f32.mrf.mxu0
    %v684 = vadd.f32 %v655, %v683
    %685 = vmatmul.f32.gmra.mxu0 %v550
    %v686 = vpop.f32.mrf.mxu0
    %v687 = vadd.f32 %v658, %v686
    %688 = vmatmul.f32.gmra.mxu0 %v551
    %v689 = vpop.f32.mrf.mxu0
    %v690 = vadd.f32 %v661, %v689
    %691 = vdwg.mxu0
    %v692 = vmax.f32 %v681, 0.0
    %v693 = vmax.f32 %v684, 0.0
    %v694 = vmax.f32 %v687, 0.0
    %v695 = vmax.f32 %v690, 0.0
    %v696 = vadd.f32 %v692, %v470
    %v697 = vadd.f32 %v693, %v471
    %v698 = vadd.f32 %v694, %v472
    %v699 = vadd.f32 %v695, %v473
    %v700 = vadd.f32 %v474, %v696
    %v701 = vadd.f32 %v475, %v697
    %v702 = vadd.f32 %v476, %v698
    %v703 = vadd.f32 %v477, %v699
    %v704 = vrot.slane %v696, 4
    %v705 = vrot.slane %v697, 4
    %v706 = vrot.slane %v698, 4
    %v707 = vrot.slane %v699, 4
    %vm708 = vcmp.lt.s32.totalorder %v201, 4
    %v709 = vsel %vm708, %v706, %v707
    %v710 = vsel %vm708, %v705, %v706
    %v711 = vsel %vm708, %v704, %v705
    %v712 = vsel %vm708, %v707, %v704
    %v713 = vadd.s32 %v249, 4294967284
    %v714 = vadd.s32 %v250, 4294967284
    %v715 = vadd.s32 %v251, 4294967284
    %v716 = vadd.s32 %v252, 4294967284
    %vm717 = vcmp.ge.s32.totalorder %v713, 0
    %vm718 = vcmp.ge.s32.totalorder %v714, 0
    %vm719 = vcmp.ge.s32.totalorder %v715, 0
    %vm720 = vcmp.ge.s32.totalorder %v716, 0
    %vm721 = vcmp.lt.s32.totalorder %v713, 16
    %vm722 = vcmp.lt.s32.totalorder %v714, 16
    %vm723 = vcmp.lt.s32.totalorder %v715, 16
    %vm724 = vcmp.lt.s32.totalorder %v716, 16
    %vm725 = vmand %vm717, %vm721
    %vm726 = vmand %vm718, %vm722
    %vm727 = vmand %vm719, %vm723
    %vm728 = vmand %vm720, %vm724
    %v729 = vsel %vm725, 1, 0
    %v730 = vsel %vm726, 1, 0
    %v731 = vsel %vm727, 1, 0
    %v732 = vsel %vm728, 1, 0
    %vm733 = vcmp.eq.s32.totalorder %v729, 1
    %vm734 = vcmp.eq.s32.totalorder %v730, 1
    %vm735 = vcmp.eq.s32.totalorder %v731, 1
    %vm736 = vcmp.eq.s32.totalorder %v732, 1
    %v737 = vsel %vm733, %v709, 0.0
    %v738 = vsel %vm734, %v712, 0.0
    %v739 = vsel %vm735, %v711, 0.0
    %v740 = vsel %vm736, %v710, 0.0
    %v741 = vadd.s32 %v249, 12
    %v742 = vadd.s32 %v250, 12
    %v743 = vadd.s32 %v251, 12
    %v744 = vadd.s32 %v252, 12
    %vm745 = vcmp.ge.s32.totalorder %v741, 0
    %vm746 = vcmp.ge.s32.totalorder %v742, 0
    %vm747 = vcmp.ge.s32.totalorder %v743, 0
    %vm748 = vcmp.ge.s32.totalorder %v744, 0
    %vm749 = vcmp.lt.s32.totalorder %v741, 16
    %vm750 = vcmp.lt.s32.totalorder %v742, 16
    %vm751 = vcmp.lt.s32.totalorder %v743, 16
    %vm752 = vcmp.lt.s32.totalorder %v744, 16
    %vm753 = vmand %vm745, %vm749
    %vm754 = vmand %vm746, %vm750
    %vm755 = vmand %vm747, %vm751
    %vm756 = vmand %vm748, %vm752
    %v757 = vsel %vm753, 1, 0
    %v758 = vsel %vm754, 1, 0
    %v759 = vsel %vm755, 1, 0
    %v760 = vsel %vm756, 1, 0
    %vm761 = vcmp.eq.s32.totalorder %v757, 1
    %vm762 = vcmp.eq.s32.totalorder %v758, 1
    %vm763 = vcmp.eq.s32.totalorder %v759, 1
    %vm764 = vcmp.eq.s32.totalorder %v760, 1
    %v765 = vsel %vm761, %v710, 0.0
    %v766 = vsel %vm762, %v709, 0.0
    %v767 = vsel %vm763, %v712, 0.0
    %v768 = vsel %vm764, %v711, 0.0
    %v769 = vld [vmem:[#allocation10] sm:$0xff]
    %v770 = vld [vmem:[#allocation10 + $0x8] sm:$0xff]
    %v771 = vld [vmem:[#allocation10 + $0x10] sm:$0xff]
    %v772 = vld [vmem:[#allocation10 + $0x18] sm:$0xff]
    %v773 = vld [vmem:[#allocation10 + $0x20] sm:$0xff]
    %v774 = vld [vmem:[#allocation10 + $0x28] sm:$0xff]
    %v775 = vld [vmem:[#allocation10 + $0x30] sm:$0xff]
    %v776 = vld [vmem:[#allocation10 + $0x38] sm:$0xff]
    %v777 = vld [vmem:[#allocation10 + $0x40] sm:$0xff]
    %v778 = vld [vmem:[#allocation10 + $0x48] sm:$0xff]
    %v779 = vld [vmem:[#allocation10 + $0x50] sm:$0xff]
    %v780 = vld [vmem:[#allocation10 + $0x58] sm:$0xff]
    %v781 = vld [vmem:[#allocation10 + $0x60] sm:$0xff]
    %v782 = vld [vmem:[#allocation10 + $0x68] sm:$0xff]
    %v783 = vld [vmem:[#allocation10 + $0x70] sm:$0xff]
    %v784 = vld [vmem:[#allocation10 + $0x78] sm:$0xff]
    %v785 = vld [vmem:[#allocation10 + $0x80] sm:$0xff]
    %v786 = vld [vmem:[#allocation10 + $0x88] sm:$0xff]
    %v787 = vld [vmem:[#allocation10 + $0x90] sm:$0xff]
    %v788 = vld [vmem:[#allocation10 + $0x98] sm:$0xff]
    %v789 = vld [vmem:[#allocation10 + $0xa0] sm:$0xff]
    %v790 = vld [vmem:[#allocation10 + $0xa8] sm:$0xff]
    %v791 = vld [vmem:[#allocation10 + $0xb0] sm:$0xff]
    %v792 = vld [vmem:[#allocation10 + $0xb8] sm:$0xff]
    %v793 = vld [vmem:[#allocation10 + $0xc0] sm:$0xff]
    %v794 = vld [vmem:[#allocation10 + $0xc8] sm:$0xff]
    %v795 = vld [vmem:[#allocation10 + $0xd0] sm:$0xff]
    %v796 = vld [vmem:[#allocation10 + $0xd8] sm:$0xff]
    %v797 = vld [vmem:[#allocation10 + $0xe0] sm:$0xff]
    %v798 = vld [vmem:[#allocation10 + $0xe8] sm:$0xff]
    %v799 = vld [vmem:[#allocation10 + $0xf0] sm:$0xff]
    %v800 = vld [vmem:[#allocation10 + $0xf8] sm:$0xff]
    %v801 = vld [vmem:[#allocation10 + $0x100] sm:$0xff]
    %v802 = vld [vmem:[#allocation10 + $0x108] sm:$0xff]
    %v803 = vld [vmem:[#allocation10 + $0x110] sm:$0xff]
    %v804 = vld [vmem:[#allocation10 + $0x118] sm:$0xff]
    %v805 = vld [vmem:[#allocation10 + $0x120] sm:$0xff]
    %v806 = vld [vmem:[#allocation10 + $0x128] sm:$0xff]
    %v807 = vld [vmem:[#allocation10 + $0x130] sm:$0xff]
    %v808 = vld [vmem:[#allocation10 + $0x138] sm:$0xff]
    %v809 = vld [vmem:[#allocation10 + $0x140] sm:$0xff]
    %v810 = vld [vmem:[#allocation10 + $0x148] sm:$0xff]
    %v811 = vld [vmem:[#allocation10 + $0x150] sm:$0xff]
    %v812 = vld [vmem:[#allocation10 + $0x158] sm:$0xff]
    %v813 = vld [vmem:[#allocation10 + $0x160] sm:$0xff]
    %v814 = vld [vmem:[#allocation10 + $0x168] sm:$0xff]
    %v815 = vld [vmem:[#allocation10 + $0x170] sm:$0xff]
    %v816 = vld [vmem:[#allocation10 + $0x178] sm:$0xff]
    %s817 = scalar_lea.vmem %s8, 2
    %v818 = vld [vmem:[%s817] sm:$0x1]
    %v820 = vperm.slane %v818, 0
    %822 = vmatpush.msra.mxu0 %v784
    %823 = vmatpush.msra.mxu0 %v783
    %824 = vmatpush.msra.mxu0 %v782
    %825 = vmatpush.msra.mxu0 %v781
    %826 = vmatpush.msra.mxu0 %v780
    %827 = vmatpush.msra.mxu0 %v779
    %828 = vmatpush.msra.mxu0 %v778
    %829 = vmatpush.msra.mxu0 %v777
    %830 = vmatpush.msra.mxu0 %v776
    %831 = vmatpush.msra.mxu0 %v775
    %832 = vmatpush.msra.mxu0 %v774
    %833 = vmatpush.msra.mxu0 %v773
    %834 = vmatpush.msra.mxu0 %v772
    %835 = vmatpush.msra.mxu0 %v771
    %836 = vmatpush.msra.mxu0 %v770
    %837 = vmatpush.msra.mxu0 %v769
    %838 = vmatmul.f32.gmra.mxu0 %v737
    %v839 = vpop.f32.mrf.mxu0
    %v840 = vadd.f32 %v820, %v839
    %841 = vmatmul.f32.gmra.mxu0 %v738
    %v842 = vpop.f32.mrf.mxu0
    %v843 = vadd.f32 %v820, %v842
    %844 = vmatmul.f32.gmra.mxu0 %v739
    %v845 = vpop.f32.mrf.mxu0
    %v846 = vadd.f32 %v820, %v845
    %847 = vmatmul.f32.gmra.mxu0 %v740
    %v848 = vpop.f32.mrf.mxu0
    %v849 = vadd.f32 %v820, %v848
    %850 = vdwg.mxu0
    %851 = vmatpush.msra.mxu0 %v800
    %852 = vmatpush.msra.mxu0 %v799
    %853 = vmatpush.msra.mxu0 %v798
    %854 = vmatpush.msra.mxu0 %v797
    %855 = vmatpush.msra.mxu0 %v796
    %856 = vmatpush.msra.mxu0 %v795
    %857 = vmatpush.msra.mxu0 %v794
    %858 = vmatpush.msra.mxu0 %v793
    %859 = vmatpush.msra.mxu0 %v792
    %860 = vmatpush.msra.mxu0 %v791
    %861 = vmatpush.msra.mxu0 %v790
    %862 = vmatpush.msra.mxu0 %v789
    %863 = vmatpush.msra.mxu0 %v788
    %864 = vmatpush.msra.mxu0 %v787
    %865 = vmatpush.msra.mxu0 %v786
    %866 = vmatpush.msra.mxu0 %v785
    %867 = vmatmul.f32.gmra.mxu0 %v696
    %v868 = vpop.f32.mrf.mxu0
    %v869 = vadd.f32 %v840, %v868
    %870 = vmatmul.f32.gmra.mxu0 %v697
    %v871 = vpop.f32.mrf.mxu0
    %v872 = vadd.f32 %v843, %v871
    %873 = vmatmul.f32.gmra.mxu0 %v698
    %v874 = vpop.f32.mrf.mxu0
    %v875 = vadd.f32 %v846, %v874
    %876 = vmatmul.f32.gmra.mxu0 %v699
    %v877 = vpop.f32.mrf.mxu0
    %v878 = vadd.f32 %v849, %v877
    %879 = vdwg.mxu0
    %880 = vmatpush.msra.mxu0 %v816
    %881 = vmatpush.msra.mxu0 %v815
    %882 = vmatpush.msra.mxu0 %v814
    %883 = vmatpush.msra.mxu0 %v813
    %884 = vmatpush.msra.mxu0 %v812
    %885 = vmatpush.msra.mxu0 %v811
    %886 = vmatpush.msra.mxu0 %v810
    %887 = vmatpush.msra.mxu0 %v809
    %888 = vmatpush.msra.mxu0 %v808
    %889 = vmatpush.msra.mxu0 %v807
    %890 = vmatpush.msra.mxu0 %v806
    %891 = vmatpush.msra.mxu0 %v805
    %892 = vmatpush.msra.mxu0 %v804
    %893 = vmatpush.msra.mxu0 %v803
    %894 = vmatpush.msra.mxu0 %v802
    %895 = vmatpush.msra.mxu0 %v801
    %896 = vmatmul.f32.gmra.mxu0 %v765
    %v897 = vpop.f32.mrf.mxu0
    %v898 = vadd.f32 %v869, %v897
    %899 = vmatmul.f32.gmra.mxu0 %v766
    %v900 = vpop.f32.mrf.mxu0
    %v901 = vadd.f32 %v872, %v900
    %902 = vmatmul.f32.gmra.mxu0 %v767
    %v903 = vpop.f32.mrf.mxu0
    %v904 = vadd.f32 %v875, %v903
    %905 = vmatmul.f32.gmra.mxu0 %v768
    %v906 = vpop.f32.mrf.mxu0
    %v907 = vadd.f32 %v878, %v906
    %908 = vdwg.mxu0
    %v909 = vmax.f32 %v898, 0.0
    %v910 = vmax.f32 %v901, 0.0
    %v911 = vmax.f32 %v904, 0.0
    %v912 = vmax.f32 %v907, 0.0
    %v913 = vadd.f32 %v909, %v696
    %v914 = vadd.f32 %v910, %v697
    %v915 = vadd.f32 %v911, %v698
    %v916 = vadd.f32 %v912, %v699
    %v917 = vadd.f32 %v700, %v913
    %v918 = vadd.f32 %v701, %v914
    %v919 = vadd.f32 %v702, %v915
    %v920 = vadd.f32 %v703, %v916
    %v921 = vld [vmem:[#allocation11] sm:$0xff]
    %v922 = vld [vmem:[#allocation11 + $0x8] sm:$0xff]
    %v923 = vld [vmem:[#allocation11 + $0x10] sm:$0xff]
    %v924 = vld [vmem:[#allocation11 + $0x18] sm:$0xff]
    %v925 = vld [vmem:[#allocation11 + $0x20] sm:$0xff]
    %v926 = vld [vmem:[#allocation11 + $0x28] sm:$0xff]
    %v927 = vld [vmem:[#allocation11 + $0x30] sm:$0xff]
    %v928 = vld [vmem:[#allocation11 + $0x38] sm:$0xff]
    %v929 = vld [vmem:[#allocation11 + $0x40] sm:$0xff]
    %v930 = vld [vmem:[#allocation11 + $0x48] sm:$0xff]
    %v931 = vld [vmem:[#allocation11 + $0x50] sm:$0xff]
    %v932 = vld [vmem:[#allocation11 + $0x58] sm:$0xff]
    %v933 = vld [vmem:[#allocation11 + $0x60] sm:$0xff]
    %v934 = vld [vmem:[#allocation11 + $0x68] sm:$0xff]
    %v935 = vld [vmem:[#allocation11 + $0x70] sm:$0xff]
    %v936 = vld [vmem:[#allocation11 + $0x78] sm:$0xff]
    %s937 = scalar_lea.vmem %s8, 3
    %v938 = vld [vmem:[%s937] sm:$0x1]
    %v940 = vperm.slane %v938, 0
    %942 = vmatpush.msra.mxu0 %v936
    %943 = vmatpush.msra.mxu0 %v935
    %944 = vmatpush.msra.mxu0 %v934
    %945 = vmatpush.msra.mxu0 %v933
    %946 = vmatpush.msra.mxu0 %v932
    %947 = vmatpush.msra.mxu0 %v931
    %948 = vmatpush.msra.mxu0 %v930
    %949 = vmatpush.msra.mxu0 %v929
    %950 = vmatpush.msra.mxu0 %v928
    %951 = vmatpush.msra.mxu0 %v927
    %952 = vmatpush.msra.mxu0 %v926
    %953 = vmatpush.msra.mxu0 %v925
    %954 = vmatpush.msra.mxu0 %v924
    %955 = vmatpush.msra.mxu0 %v923
    %956 = vmatpush.msra.mxu0 %v922
    %957 = vmatpush.msra.mxu0 %v921
    %958 = vmatmul.f32.gmra.mxu0 %v913
    %v959 = vpop.f32.mrf.mxu0
    %v960 = vadd.f32 %v940, %v959
    %961 = vmatmul.f32.gmra.mxu0 %v914
    %v962 = vpop.f32.mrf.mxu0
    %v963 = vadd.f32 %v940, %v962
    %964 = vmatmul.f32.gmra.mxu0 %v915
    %v965 = vpop.f32.mrf.mxu0
    %v966 = vadd.f32 %v940, %v965
    %967 = vmatmul.f32.gmra.mxu0 %v916
    %v968 = vpop.f32.mrf.mxu0
    %v969 = vadd.f32 %v940, %v968
    %970 = vdwg.mxu0
    %v971 = vmax.f32 %v960, 0.0
    %v972 = vmax.f32 %v963, 0.0
    %v973 = vmax.f32 %v966, 0.0
    %v974 = vmax.f32 %v969, 0.0
    %v975 = vadd.f32 %v971, %v913
    %v976 = vadd.f32 %v972, %v914
    %v977 = vadd.f32 %v973, %v915
    %v978 = vadd.f32 %v974, %v916
    %v979 = vadd.f32 %v917, %v975
    %v980 = vadd.f32 %v918, %v976
    %v981 = vadd.f32 %v919, %v977
    %v982 = vadd.f32 %v920, %v978
    %v983 = vld [vmem:[#allocation13] sm:$0xff]
    %v984 = vld [vmem:[#allocation13 + $0x8] sm:$0xff]
    %v985 = vld [vmem:[#allocation13 + $0x10] sm:$0xff]
    %v986 = vld [vmem:[#allocation13 + $0x18] sm:$0xff]
    %v987 = vld [vmem:[#allocation13 + $0x20] sm:$0xff]
    %v988 = vld [vmem:[#allocation13 + $0x28] sm:$0xff]
    %v989 = vld [vmem:[#allocation13 + $0x30] sm:$0xff]
    %v990 = vld [vmem:[#allocation13 + $0x38] sm:$0xff]
    %v991 = vld [vmem:[#allocation13 + $0x40] sm:$0xff]
    %v992 = vld [vmem:[#allocation13 + $0x48] sm:$0xff]
    %v993 = vld [vmem:[#allocation13 + $0x50] sm:$0xff]
    %v994 = vld [vmem:[#allocation13 + $0x58] sm:$0xff]
    %v995 = vld [vmem:[#allocation13 + $0x60] sm:$0xff]
    %v996 = vld [vmem:[#allocation13 + $0x68] sm:$0xff]
    %v997 = vld [vmem:[#allocation13 + $0x70] sm:$0xff]
    %v998 = vld [vmem:[#allocation13 + $0x78] sm:$0xff]
    %s999 = scalar_lea.vmem %s8, 4
    %v1000 = vld [vmem:[%s999] sm:$0x1]
    %v1002 = vperm.slane %v1000, 0
    %1004 = vmatpush.msra.mxu0 %v998
    %1005 = vmatpush.msra.mxu0 %v997
    %1006 = vmatpush.msra.mxu0 %v996
    %1007 = vmatpush.msra.mxu0 %v995
    %1008 = vmatpush.msra.mxu0 %v994
    %1009 = vmatpush.msra.mxu0 %v993
    %1010 = vmatpush.msra.mxu0 %v992
    %1011 = vmatpush.msra.mxu0 %v991
    %1012 = vmatpush.msra.mxu0 %v990
    %1013 = vmatpush.msra.mxu0 %v989
    %1014 = vmatpush.msra.mxu0 %v988
    %1015 = vmatpush.msra.mxu0 %v987
    %1016 = vmatpush.msra.mxu0 %v986
    %1017 = vmatpush.msra.mxu0 %v985
    %1018 = vmatpush.msra.mxu0 %v984
    %1019 = vmatpush.msra.mxu0 %v983
    %1020 = vmatmul.f32.gmra.mxu0 %v975
    %v1021 = vpop.f32.mrf.mxu0
    %v1022 = vadd.f32 %v1002, %v1021
    %1023 = vmatmul.f32.gmra.mxu0 %v976
    %v1024 = vpop.f32.mrf.mxu0
    %v1025 = vadd.f32 %v1002, %v1024
    %1026 = vmatmul.f32.gmra.mxu0 %v977
    %v1027 = vpop.f32.mrf.mxu0
    %v1028 = vadd.f32 %v1002, %v1027
    %1029 = vmatmul.f32.gmra.mxu0 %v978
    %v1030 = vpop.f32.mrf.mxu0
    %v1031 = vadd.f32 %v1002, %v1030
    %1032 = vdwg.mxu0
    %v1033 = vmax.f32 %v1022, 0.0
    %v1034 = vmax.f32 %v1025, 0.0
    %v1035 = vmax.f32 %v1028, 0.0
    %v1036 = vmax.f32 %v1031, 0.0
    %v1037 = vadd.f32 %v1033, %v975
    %v1038 = vadd.f32 %v1034, %v976
    %v1039 = vadd.f32 %v1035, %v977
    %v1040 = vadd.f32 %v1036, %v978
    %v1041 = vadd.f32 %v979, %v1037
    %v1042 = vadd.f32 %v980, %v1038
    %v1043 = vadd.f32 %v981, %v1039
    %v1044 = vadd.f32 %v982, %v1040
    %1045 = vst [vmem:[#allocation14] sm:$0xff] %v1041
    %1046 = vst [vmem:[#allocation14 + $0x8] sm:$0xff] %v1042
    %1047 = vst [vmem:[#allocation14 + $0x10] sm:$0xff] %v1043
    %1048 = vst [vmem:[#allocation14 + $0x18] sm:$0xff] %v1044
    // Predicated region
    $region66: #{tpu_custom_call.1} parent=1 // pred_check
      _
    $region67: #{tpu_custom_call.1} parent=1 // pred_check_branch
      %1050 = sbr.rel (0) target = $region69
    $region68: #{tpu_custom_call.1} parent=1 // pred_region
      %1052 = vsyncadd [#allocation4], 0
      %s1053 = sshll.u32 [#allocation14], 4
      %s1054 = int_to_ptr.vmem [resolvable:$true] %s1053
      %s1055 = sshll.u32 %s9, 4
      %s1056 = int_to_ptr.hbm [resolvable:$true] %s1055
      %1061 = dma.vmem_to_hbm [thread:$0]  %s1054, 512, %s1056, [#allocation4], 128, 128, 8
    $region69: #{tpu_custom_call.1} parent=1 // pred_fallthru
      _
    // Predicated region
    $region70: #{tpu_custom_call.1} parent=1 // pred_check
      _
    $region71: #{tpu_custom_call.1} parent=1 // pred_check_branch
      %1063 = sbr.rel (0) target = $region73
    $region72: #{tpu_custom_call.1} parent=1 // pred_region
      %1065 = dma.done [#allocation4], 512
    $region73: #{tpu_custom_call.1} parent=1 // pred_fallthru
      _
    %1066 = vsyncpa [#allocation3], 1
    %1067 = vsyncpa [#allocation6], 1
    %1068 = vsyncpa [#allocation9], 1
    %1069 = vsyncpa [#allocation12], 1
    %1070 = vsyncpa [#allocation4], 1

</llo_original>
